<compile_context>
chip_gen: v6e
topology: v6e:2x2x1
jax: 0.10.0
libtpu: 0.0.40
codegen_flags: <defaults>
</compile_context>

<pallas_src>
import functools

import jax
import jax.numpy as jnp
from jax import lax
from jax.experimental import pallas as pl
from jax.experimental.pallas import tpu as pltpu


_VMEM_SPEC = pl.BlockSpec(memory_space=pltpu.MemorySpace.VMEM)


def _round_up(x, m):
    return (x + m - 1) // m * m


# ----------------------------------------------------------------------------
# Fused kernel: num_layers LSTM layers + fc head, everything VMEM-resident.
# ----------------------------------------------------------------------------
def _sohlstm_fused_kernel(*refs, num_layers, seq_len, batch_pad, hidden,
                          gate_pad):
    """Fused SOHLSTM forward.

    refs (in order):
      inputs : x2d (T*Bp, I0) bf16,
               [w_ih_l (in_l, Gp) bf16, w_hh_l (H, Gp) bf16, b_l (1, Gp) f32]*L,
               w1 (H, H2) bf16, b1 (1, H2) f32, w2 (1, H2) f32, b2 (1, 1) f32
      outputs: out (Bp, 1) f32
      scratch: seq  (T*Bp, H)  bf16  inter-layer hidden sequence (VMEM only)
               gbuf (T*Bp, Gp) f32   hoisted per-timestep gate pre-activations
    Gate order matches PyTorch: i, f, g, o (packed, each width H).
    The g-gate columns of W/b were pre-scaled by 2 so tanh is recovered from
    the single sigmoid sweep as 2*sigmoid(2x)-1.
    """
    L, T, Bp, H, Gp = num_layers, seq_len, batch_pad, hidden, gate_pad
    n_in = 1 + 3 * L + 4
    x_ref = refs[0]
    layer_refs = refs[1:1 + 3 * L]
    w1_ref, b1_ref, w2_ref, b2_ref = refs[1 + 3 * L:n_in]
    out_ref = refs[n_in]
    seq_ref = refs[n_in + 1]
    gbuf_ref = refs[n_in + 2]

    # Per-lane fixup constants so ONE sigmoid sweep covers i/f/o (sigmoid) and
    # g (tanh = 2*sigmoid(2x)-1).  Hoisted (incl. the broadcast) out of all
    # loops — JAX does not CSE broadcast_in_dim.
    lane = lax.broadcasted_iota(jnp.int32, (1, Gp), 1)
    is_g = jnp.logical_and(lane >= 2 * H, lane < 3 * H)
    act_mul = jnp.broadcast_to(
        jnp.where(is_g, 2.0, 1.0).astype(jnp.float32), (Bp, Gp))
    act_add = jnp.broadcast_to(
        jnp.where(is_g, -1.0, 0.0).astype(jnp.float32), (Bp, Gp))

    h_last = jnp.zeros((Bp, H), jnp.float32)

    for layer in range(L):
        w_ih_ref = layer_refs[3 * layer + 0]
        w_hh_ref = layer_refs[3 * layer + 1]
        b_ref = layer_refs[3 * layer + 2]
        is_last = layer == L - 1

        # Hoisted input projection: ONE big bf16 MXU matmul (f32 accumulation)
        # for every timestep, bias folded in once.
        in_seq = x_ref[...] if layer == 0 else seq_ref[...]
        gbuf_ref[...] = (
            jnp.dot(in_seq, w_ih_ref[...], preferred_element_type=jnp.float32)
            + b_ref[...]
        )

        def step(t, carry, *, _is_last=is_last, _w_hh_ref=w_hh_ref):
            h, c = carry
            off = pl.multiple_of(t * Bp, Bp)
            # Recurrent matmul: (Bp,H) bf16 x (H,Gp) bf16 -> single f32 tile.
            # RHS is read from its VMEM ref each step (re-streamed, not held
            # live across the whole unrolled loop).
            gates = gbuf_ref[pl.ds(off, Bp), :] + jnp.dot(
                h.astype(jnp.bfloat16), _w_hh_ref[...],
                preferred_element_type=jnp.float32)
            # One full-tile EUP sweep + per-lane FMA fixup (VPU slack).
            act = jax.nn.sigmoid(gates) * act_mul + act_add
            i_g = act[:, 0 * H:1 * H]
            f_g = act[:, 1 * H:2 * H]
            g_g = act[:, 2 * H:3 * H]
            o_g = act[:, 3 * H:4 * H]
            c_new = f_g * c + i_g * g_g
            h_new = o_g * jnp.tanh(c_new)
            if not _is_last:
                # bf16 store into VMEM scratch; next layer consumes it
                # directly as a bf16 matmul operand.
                seq_ref[pl.ds(off, Bp), :] = h_new.astype(jnp.bfloat16)
            return (h_new, c_new)

        init = (jnp.zeros((Bp, H), jnp.float32),
                jnp.zeros((Bp, H), jnp.float32))
        # T is small & static: fully unroll so consecutive steps interleave.
        h_last, _ = lax.fori_loop(0, T, step, init, unroll=True)

    # fc head: Linear -> LeakyReLU(0.01) -> [Dropout = identity] -> Linear.
    # TODO(synk): Dropout layers are identity here (eval-mode semantics).
    z = jnp.dot(h_last.astype(jnp.bfloat16), w1_ref[...],
                preferred_element_type=jnp.float32) + b1_ref[...]
    z = jnp.where(z >= 0, z, 0.01 * z)
    # N=1 output matmul done as VPU multiply + cross-lane reduction (no MXU
    # push/pop for a single-lane result in the epilogue).
    out_ref[...] = (jnp.sum(z * w2_ref[...], axis=-1, keepdims=True)
                    + b2_ref[...])


# ----------------------------------------------------------------------------
# Parameter preparation (packed gates, g-gate 2x pre-scale, bf16 MXU operands)
# ----------------------------------------------------------------------------
def prepare_params(params):
    """Prep PyTorch-shaped params for the kernel.

    * Gates stay packed: (rows, 4H) padded only at the tail to Gp=round_up(4H,128).
    * g-gate columns of W_ih / W_hh / b scaled by 2 (exact power-of-two scale)
      so the kernel recovers tanh from the single sigmoid sweep.
    * Matmul operands cast to bf16; biases stay f32.
    """
    H = params["lstm"][0]["w_hh"].shape[0]
    G = 4 * H
    Gp = _round_up(G, 128)

    def scale_g(w):
        return w.at[:, 2 * H:3 * H].multiply(2.0)

    def pad_g(w):
        return jnp.pad(w, ((0, 0), (0, Gp - G)))

    prepared = {"lstm": [], "fc": {}, "H": H, "Gp": Gp}
    for layer in params["lstm"]:
        prepared["lstm"].append({
            "w_ih": pad_g(scale_g(layer["w_ih"])).astype(jnp.bfloat16),
            "w_hh": pad_g(scale_g(layer["w_hh"])).astype(jnp.bfloat16),
            "b": pad_g(scale_g(layer["b"])).astype(jnp.float32),
        })

    fc = params["fc"]
    prepared["fc"] = {
        "w1": fc["w1"].astype(jnp.bfloat16),
        "b1": fc["b1"].astype(jnp.float32),
        "w2": fc["w2"].reshape(1, -1).astype(jnp.float32),  # row for VPU reduce
        "b2": fc["b2"].astype(jnp.float32),
    }
    return prepared


# ----------------------------------------------------------------------------
# Wrapper
# ----------------------------------------------------------------------------
def sohlstm_forward(x, params):
    """x: (B, T, I) batch-first, like the PyTorch module.  Returns (B,)."""
    B, T, I = x.shape
    pp = prepare_params(params)
    L = len(pp["lstm"])
    H, Gp = pp["H"], pp["Gp"]
    Bp = _round_up(B, 8)

    # Time-major, batch padded to the f32 sublane multiple, flattened so that
    # timestep t occupies rows [t*Bp, (t+1)*Bp); cast to bf16 (MXU operand).
    x_tm = jnp.transpose(x.astype(jnp.float32), (1, 0, 2))     # (T, B, I)
    x_tm = jnp.pad(x_tm, ((0, 0), (0, Bp - B), (0, 0)))        # (T, Bp, I)
    x2d = x_tm.reshape(T * Bp, I).astype(jnp.bfloat16)

    flat = [x2d]
    for layer in pp["lstm"]:
        flat += [layer["w_ih"], layer["w_hh"], layer["b"]]
    fc = pp["fc"]
    flat += [fc["w1"], fc["b1"], fc["w2"], fc["b2"]]

    kernel = functools.partial(
        _sohlstm_fused_kernel,
        num_layers=L, seq_len=T, batch_pad=Bp, hidden=H, gate_pad=Gp)

    # TODO(synk): add a 'parallel' batch grid axis + T-chunked gbuf pipelining
    # (and HBM-resident weights with async prefetch) for production shapes /
    # v7x; at these toy shapes everything fits comfortably in VMEM.
    out = pl.pallas_call(
        kernel,
        out_shape=jax.ShapeDtypeStruct((Bp, 1), jnp.float32),
        in_specs=[_VMEM_SPEC] * len(flat),
        out_specs=_VMEM_SPEC,
        scratch_shapes=[
            pltpu.VMEM((T * Bp, H), jnp.bfloat16),     # inter-layer h seq
            pltpu.VMEM((T * Bp, Gp), jnp.float32),     # hoisted gate pre-acts
        ],
    )(*flat)
    return out[:B, 0]                                          # squeeze(-1)


# ----------------------------------------------------------------------------
# Parameter init (PyTorch-like shapes, kept unpadded; prep done separately)
# ----------------------------------------------------------------------------
def init_params(key, input_size, hidden_size, num_layers):
    H = hidden_size
    k_lstm = 1.0 / jnp.sqrt(H)
    params = {"lstm": [], "fc": {}}
    for layer in range(num_layers):
        in_f = input_size if layer == 0 else H
        key, k1, k2, k3, k4 = jax.random.split(key, 5)
        # PyTorch stores (4H, in) / (4H, H); we keep the transposed layout.
        w_ih = jax.random.uniform(k1, (in_f, 4 * H), jnp.float32, -k_lstm, k_lstm)
        w_hh = jax.random.uniform(k2, (H, 4 * H), jnp.float32, -k_lstm, k_lstm)
        b_ih = jax.random.uniform(k3, (4 * H,), jnp.float32, -k_lstm, k_lstm)
        b_hh = jax.random.uniform(k4, (4 * H,), jnp.float32, -k_lstm, k_lstm)
        params["lstm"].append(
            {"w_ih": w_ih, "w_hh": w_hh, "b": (b_ih + b_hh).reshape(1, 4 * H)}
        )
    H2 = H // 2
    key, k1, k2, k3, k4 = jax.random.split(key, 5)
    kf1 = 1.0 / jnp.sqrt(H)
    kf2 = 1.0 / jnp.sqrt(H2)
    params["fc"] = {
        "w1": jax.random.uniform(k1, (H, H2), jnp.float32, -kf1, kf1),
        "b1": jax.random.uniform(k2, (1, H2), jnp.float32, -kf1, kf1),
        "w2": jax.random.uniform(k3, (H2, 1), jnp.float32, -kf2, kf2),
        "b2": jax.random.uniform(k4, (1, 1), jnp.float32, -kf2, kf2),
    }
    return params


# ----------------------------------------------------------------------------
# Pure-JAX reference (for correctness check only).  matmul_dtype=bf16 mirrors
# the kernel's numerics (bf16 MXU operands, f32 accumulation, bf16 hidden
# sequence between layers) so a tight tolerance remains meaningful.
# ----------------------------------------------------------------------------
def sohlstm_reference(x, params, matmul_dtype=jnp.float32):
    x = x.astype(jnp.float32)
    B = x.shape[0]

    def mm(a, b):
        return jnp.dot(a.astype(matmul_dtype), b.astype(matmul_dtype),
                       preferred_element_type=jnp.float32)

    h_seq = x
    for layer in params["lstm"]:
        H = layer["w_hh"].shape[0]

        def step(carry, x_t, *, _layer=layer, _H=H):
            h, c = carry
            gates = (mm(x_t, _layer["w_ih"]) + _layer["b"]) + mm(h, _layer["w_hh"])
            i_g = jax.nn.sigmoid(gates[:, 0 * _H:1 * _H])
            f_g = jax.nn.sigmoid(gates[:, 1 * _H:2 * _H])
            g_g = jnp.tanh(gates[:, 2 * _H:3 * _H])
            o_g = jax.nn.sigmoid(gates[:, 3 * _H:4 * _H])
            c = f_g * c + i_g * g_g
            h = o_g * jnp.tanh(c)
            return (h, c), h

        init = (jnp.zeros((B, H), jnp.float32), jnp.zeros((B, H), jnp.float32))
        (_, _), hs = lax.scan(step, init, jnp.transpose(h_seq, (1, 0, 2)))
        h_seq = jnp.transpose(hs, (1, 0, 2))
        if matmul_dtype != jnp.float32:
            # Mirror the kernel's bf16 inter-layer hidden-sequence scratch.
            h_seq = h_seq.astype(matmul_dtype).astype(jnp.float32)

    h_last = h_seq[:, -1]
    fc = params["fc"]
    z = mm(h_last, fc["w1"]) + fc["b1"]
    z = jnp.where(z >= 0, z, 0.01 * z)
    y = z @ fc["w2"] + fc["b2"]
    return y[:, 0]


if __name__ == "__main__":
    # Small shapes: batch=2, seq=8, input_size=4, hidden=32, num_layers=2
    batch, seq, input_size, hidden_size, num_layers = 2, 8, 4, 32, 2

    key = jax.random.PRNGKey(0)
    key, kx, kp = jax.random.split(key, 3)
    x = jax.random.normal(kx, (batch, seq, input_size), jnp.float32)
    params = init_params(kp, input_size, hidden_size, num_layers)

    out = sohlstm_forward(x, params)
    out = jax.block_until_ready(out)
    assert out.shape == (batch,), out.shape

    # Tight check against a numerics-matched (bf16-MXU-operand) reference.
    ref_bf16 = jax.block_until_ready(
        sohlstm_reference(x, params, matmul_dtype=jnp.bfloat16))
    assert jnp.allclose(out, ref_bf16, atol=5e-3, rtol=5e-3), (out, ref_bf16)

    # Loose sanity check against the full-f32 reference (bf16 matmul rounding
    # accumulated over T steps bounds the difference).
    ref_f32 = jax.block_until_ready(sohlstm_reference(x, params))
    assert jnp.allclose(out, ref_f32, atol=1e-1, rtol=1e-1), (out, ref_f32)

    print("KERNEL_OK")
</pallas_src>

<mosaic_0001>
module attributes {stable_mosaic.version = 11 : i64} {
  func.func @_sohlstm_fused_kernel(%arg0: memref<64x4xbf16, #tpu.memory_space<vmem>>, %arg1: memref<4x128xbf16, #tpu.memory_space<vmem>>, %arg2: memref<32x128xbf16, #tpu.memory_space<vmem>>, %arg3: memref<1x128xf32, #tpu.memory_space<vmem>>, %arg4: memref<32x128xbf16, #tpu.memory_space<vmem>>, %arg5: memref<32x128xbf16, #tpu.memory_space<vmem>>, %arg6: memref<1x128xf32, #tpu.memory_space<vmem>>, %arg7: memref<32x16xbf16, #tpu.memory_space<vmem>>, %arg8: memref<1x16xf32, #tpu.memory_space<vmem>>, %arg9: memref<1x16xf32, #tpu.memory_space<vmem>>, %arg10: memref<1x1xf32, #tpu.memory_space<vmem>>, %arg11: memref<8x1xf32, #tpu.memory_space<vmem>>, %arg12: memref<64x32xbf16, #tpu.memory_space<vmem>>, %arg13: memref<64x128xf32, #tpu.memory_space<vmem>>) attributes {dimension_semantics = [], scalar_prefetch = 0 : i64, scratch_operands = 2 : i64, tpu.core_type = #tpu.core_type<tc>} {
    %0 = tpu.iota {dimensions = array<i32: 1>} : vector<1x128xi32>
    %c64_i32 = arith.constant 64 : i32
    %1 = vector.broadcast %c64_i32 : i32 to vector<1x128xi32>
    %2 = arith.cmpi sge, %0, %1 : vector<1x128xi32>
    %c96_i32 = arith.constant 96 : i32
    %3 = vector.broadcast %c96_i32 : i32 to vector<1x128xi32>
    %4 = arith.cmpi slt, %0, %3 : vector<1x128xi32>
    %5 = arith.andi %2, %4 : vector<1x128xi1>
    %cst = arith.constant 2.000000e+00 : f32
    %cst_0 = arith.constant 1.000000e+00 : f32
    %6 = vector.broadcast %cst : f32 to vector<1x128xf32>
    %7 = vector.broadcast %cst_0 : f32 to vector<1x128xf32>
    %8 = arith.select %5, %6, %7 : vector<1x128xi1>, vector<1x128xf32>
    %9 = vector.shape_cast %8 : vector<1x128xf32> to vector<1x128xf32>
    %10 = vector.broadcast %9 : vector<1x128xf32> to vector<8x128xf32>
    %cst_1 = arith.constant -1.000000e+00 : f32
    %cst_2 = arith.constant 0.000000e+00 : f32
    %11 = vector.broadcast %cst_1 : f32 to vector<1x128xf32>
    %12 = vector.broadcast %cst_2 : f32 to vector<1x128xf32>
    %13 = arith.select %5, %11, %12 : vector<1x128xi1>, vector<1x128xf32>
    %14 = vector.shape_cast %13 : vector<1x128xf32> to vector<1x128xf32>
    %15 = vector.broadcast %14 : vector<1x128xf32> to vector<8x128xf32>
    %c0 = arith.constant 0 : index
    %c0_3 = arith.constant 0 : index
    %16 = vector.load %arg0[%c0, %c0_3] : memref<64x4xbf16, #tpu.memory_space<vmem>>, vector<64x4xbf16>
    %c0_4 = arith.constant 0 : index
    %c0_5 = arith.constant 0 : index
    %17 = vector.load %arg1[%c0_4, %c0_5] : memref<4x128xbf16, #tpu.memory_space<vmem>>, vector<4x128xbf16>
    %cst_6 = arith.constant dense<0.000000e+00> : vector<64x128xf32>
    %18 = tpu.matmul %16, %17, %cst_6 {dimension_numbers = #tpu.dot_dimension_numbers<[1], [0], [0], [1], [0, 0, 1, 1], [], []>} : vector<64x4xbf16>, vector<4x128xbf16>, vector<64x128xf32> -> vector<64x128xf32>
    %c0_7 = arith.constant 0 : index
    %c0_8 = arith.constant 0 : index
    %19 = vector.load %arg3[%c0_7, %c0_8] : memref<1x128xf32, #tpu.memory_space<vmem>>, vector<1x128xf32>
    %20 = vector.broadcast %19 : vector<1x128xf32> to vector<64x128xf32>
    %21 = arith.addf %18, %20 : vector<64x128xf32>
    %c0_9 = arith.constant 0 : index
    %c0_10 = arith.constant 0 : index
    %22 = vector.load %arg13[%c0_9, %c0_10] : memref<64x128xf32, #tpu.memory_space<vmem>>, vector<64x128xf32>
    tpu.vector_store %arg13[%c0_9, %c0_10], %21 {strides = array<i32>} : memref<64x128xf32, #tpu.memory_space<vmem>>, vector<64x128xf32>,
    %cst_11 = arith.constant 0.000000e+00 : f32
    %23 = vector.broadcast %cst_11 : f32 to vector<8x32xf32>
    %cst_12 = arith.constant 0.000000e+00 : f32
    %24 = vector.broadcast %cst_12 : f32 to vector<8x32xf32>
    %c0_i32 = arith.constant 0 : i32
    %c8_i32 = arith.constant 8 : i32
    %25 = arith.muli %c0_i32, %c8_i32 : i32
    %26 = tpu.assume_multiple %25, 8 : i32
    %27 = arith.index_cast %26 : i32 to index
    %c0_13 = arith.constant 0 : index
    %28 = vector.load %arg13[%27, %c0_13] : memref<64x128xf32, #tpu.memory_space<vmem>>, vector<8x128xf32>
    %29 = arith.truncf %23 : vector<8x32xf32> to vector<8x32xbf16>
    %c0_14 = arith.constant 0 : index
    %c0_15 = arith.constant 0 : index
    %30 = vector.load %arg2[%c0_14, %c0_15] : memref<32x128xbf16, #tpu.memory_space<vmem>>, vector<32x128xbf16>
    %cst_16 = arith.constant dense<0.000000e+00> : vector<8x128xf32>
    %31 = tpu.matmul %29, %30, %cst_16 {dimension_numbers = #tpu.dot_dimension_numbers<[1], [0], [0], [1], [0, 0, 1, 1], [], []>} : vector<8x32xbf16>, vector<32x128xbf16>, vector<8x128xf32> -> vector<8x128xf32>
    %32 = arith.addf %28, %31 : vector<8x128xf32>
    %33 = arith.negf %32 : vector<8x128xf32>
    %34 = math.exp %33 : vector<8x128xf32>
    %cst_17 = arith.constant 1.000000e+00 : f32
    %35 = vector.broadcast %cst_17 : f32 to vector<8x128xf32>
    %36 = arith.addf %35, %34 : vector<8x128xf32>
    %37 = arith.divf %35, %36 : vector<8x128xf32>
    %38 = arith.mulf %37, %10 : vector<8x128xf32>
    %39 = arith.addf %38, %15 : vector<8x128xf32>
    %40 = vector.extract_strided_slice %39 {offsets = [0, 0], sizes = [8, 32], strides = [1, 1]} : vector<8x128xf32> to vector<8x32xf32>
    %41 = vector.extract_strided_slice %39 {offsets = [0, 32], sizes = [8, 32], strides = [1, 1]} : vector<8x128xf32> to vector<8x32xf32>
    %42 = vector.extract_strided_slice %39 {offsets = [0, 64], sizes = [8, 32], strides = [1, 1]} : vector<8x128xf32> to vector<8x32xf32>
    %43 = vector.extract_strided_slice %39 {offsets = [0, 96], sizes = [8, 32], strides = [1, 1]} : vector<8x128xf32> to vector<8x32xf32>
    %44 = arith.mulf %41, %24 : vector<8x32xf32>
    %45 = arith.mulf %40, %42 : vector<8x32xf32>
    %46 = arith.addf %44, %45 : vector<8x32xf32>
    %47 = math.tanh %46 : vector<8x32xf32>
    %48 = arith.mulf %43, %47 : vector<8x32xf32>
    %49 = arith.truncf %48 : vector<8x32xf32> to vector<8x32xbf16>
    %50 = arith.index_cast %26 : i32 to index
    %c0_18 = arith.constant 0 : index
    %51 = vector.load %arg12[%50, %c0_18] : memref<64x32xbf16, #tpu.memory_space<vmem>>, vector<8x32xbf16>
    tpu.vector_store %arg12[%50, %c0_18], %49 {strides = array<i32>} : memref<64x32xbf16, #tpu.memory_space<vmem>>, vector<8x32xbf16>,
    %c1_i32 = arith.constant 1 : i32
    %c8_i32_19 = arith.constant 8 : i32
    %52 = arith.muli %c1_i32, %c8_i32_19 : i32
    %53 = tpu.assume_multiple %52, 8 : i32
    %54 = arith.index_cast %53 : i32 to index
    %c0_20 = arith.constant 0 : index
    %55 = vector.load %arg13[%54, %c0_20] : memref<64x128xf32, #tpu.memory_space<vmem>>, vector<8x128xf32>
    %56 = arith.truncf %48 : vector<8x32xf32> to vector<8x32xbf16>
    %c0_21 = arith.constant 0 : index
    %c0_22 = arith.constant 0 : index
    %57 = vector.load %arg2[%c0_21, %c0_22] : memref<32x128xbf16, #tpu.memory_space<vmem>>, vector<32x128xbf16>
    %cst_23 = arith.constant dense<0.000000e+00> : vector<8x128xf32>
    %58 = tpu.matmul %56, %57, %cst_23 {dimension_numbers = #tpu.dot_dimension_numbers<[1], [0], [0], [1], [0, 0, 1, 1], [], []>} : vector<8x32xbf16>, vector<32x128xbf16>, vector<8x128xf32> -> vector<8x128xf32>
    %59 = arith.addf %55, %58 : vector<8x128xf32>
    %60 = arith.negf %59 : vector<8x128xf32>
    %61 = math.exp %60 : vector<8x128xf32>
    %cst_24 = arith.constant 1.000000e+00 : f32
    %62 = vector.broadcast %cst_24 : f32 to vector<8x128xf32>
    %63 = arith.addf %62, %61 : vector<8x128xf32>
    %64 = arith.divf %62, %63 : vector<8x128xf32>
    %65 = arith.mulf %64, %10 : vector<8x128xf32>
    %66 = arith.addf %65, %15 : vector<8x128xf32>
    %67 = vector.extract_strided_slice %66 {offsets = [0, 0], sizes = [8, 32], strides = [1, 1]} : vector<8x128xf32> to vector<8x32xf32>
    %68 = vector.extract_strided_slice %66 {offsets = [0, 32], sizes = [8, 32], strides = [1, 1]} : vector<8x128xf32> to vector<8x32xf32>
    %69 = vector.extract_strided_slice %66 {offsets = [0, 64], sizes = [8, 32], strides = [1, 1]} : vector<8x128xf32> to vector<8x32xf32>
    %70 = vector.extract_strided_slice %66 {offsets = [0, 96], sizes = [8, 32], strides = [1, 1]} : vector<8x128xf32> to vector<8x32xf32>
    %71 = arith.mulf %68, %46 : vector<8x32xf32>
    %72 = arith.mulf %67, %69 : vector<8x32xf32>
    %73 = arith.addf %71, %72 : vector<8x32xf32>
    %74 = math.tanh %73 : vector<8x32xf32>
    %75 = arith.mulf %70, %74 : vector<8x32xf32>
    %76 = arith.truncf %75 : vector<8x32xf32> to vector<8x32xbf16>
    %77 = arith.index_cast %53 : i32 to index
    %c0_25 = arith.constant 0 : index
    %78 = vector.load %arg12[%77, %c0_25] : memref<64x32xbf16, #tpu.memory_space<vmem>>, vector<8x32xbf16>
    tpu.vector_store %arg12[%77, %c0_25], %76 {strides = array<i32>} : memref<64x32xbf16, #tpu.memory_space<vmem>>, vector<8x32xbf16>,
    %c2_i32 = arith.constant 2 : i32
    %c8_i32_26 = arith.constant 8 : i32
    %79 = arith.muli %c2_i32, %c8_i32_26 : i32
    %80 = tpu.assume_multiple %79, 8 : i32
    %81 = arith.index_cast %80 : i32 to index
    %c0_27 = arith.constant 0 : index
    %82 = vector.load %arg13[%81, %c0_27] : memref<64x128xf32, #tpu.memory_space<vmem>>, vector<8x128xf32>
    %83 = arith.truncf %75 : vector<8x32xf32> to vector<8x32xbf16>
    %c0_28 = arith.constant 0 : index
    %c0_29 = arith.constant 0 : index
    %84 = vector.load %arg2[%c0_28, %c0_29] : memref<32x128xbf16, #tpu.memory_space<vmem>>, vector<32x128xbf16>
    %cst_30 = arith.constant dense<0.000000e+00> : vector<8x128xf32>
    %85 = tpu.matmul %83, %84, %cst_30 {dimension_numbers = #tpu.dot_dimension_numbers<[1], [0], [0], [1], [0, 0, 1, 1], [], []>} : vector<8x32xbf16>, vector<32x128xbf16>, vector<8x128xf32> -> vector<8x128xf32>
    %86 = arith.addf %82, %85 : vector<8x128xf32>
    %87 = arith.negf %86 : vector<8x128xf32>
    %88 = math.exp %87 : vector<8x128xf32>
    %cst_31 = arith.constant 1.000000e+00 : f32
    %89 = vector.broadcast %cst_31 : f32 to vector<8x128xf32>
    %90 = arith.addf %89, %88 : vector<8x128xf32>
    %91 = arith.divf %89, %90 : vector<8x128xf32>
    %92 = arith.mulf %91, %10 : vector<8x128xf32>
    %93 = arith.addf %92, %15 : vector<8x128xf32>
    %94 = vector.extract_strided_slice %93 {offsets = [0, 0], sizes = [8, 32], strides = [1, 1]} : vector<8x128xf32> to vector<8x32xf32>
    %95 = vector.extract_strided_slice %93 {offsets = [0, 32], sizes = [8, 32], strides = [1, 1]} : vector<8x128xf32> to vector<8x32xf32>
    %96 = vector.extract_strided_slice %93 {offsets = [0, 64], sizes = [8, 32], strides = [1, 1]} : vector<8x128xf32> to vector<8x32xf32>
    %97 = vector.extract_strided_slice %93 {offsets = [0, 96], sizes = [8, 32], strides = [1, 1]} : vector<8x128xf32> to vector<8x32xf32>
    %98 = arith.mulf %95, %73 : vector<8x32xf32>
    %99 = arith.mulf %94, %96 : vector<8x32xf32>
    %100 = arith.addf %98, %99 : vector<8x32xf32>
    %101 = math.tanh %100 : vector<8x32xf32>
    %102 = arith.mulf %97, %101 : vector<8x32xf32>
    %103 = arith.truncf %102 : vector<8x32xf32> to vector<8x32xbf16>
    %104 = arith.index_cast %80 : i32 to index
    %c0_32 = arith.constant 0 : index
    %105 = vector.load %arg12[%104, %c0_32] : memref<64x32xbf16, #tpu.memory_space<vmem>>, vector<8x32xbf16>
    tpu.vector_store %arg12[%104, %c0_32], %103 {strides = array<i32>} : memref<64x32xbf16, #tpu.memory_space<vmem>>, vector<8x32xbf16>,
    %c3_i32 = arith.constant 3 : i32
    %c8_i32_33 = arith.constant 8 : i32
    %106 = arith.muli %c3_i32, %c8_i32_33 : i32
    %107 = tpu.assume_multiple %106, 8 : i32
    %108 = arith.index_cast %107 : i32 to index
    %c0_34 = arith.constant 0 : index
    %109 = vector.load %arg13[%108, %c0_34] : memref<64x128xf32, #tpu.memory_space<vmem>>, vector<8x128xf32>
    %110 = arith.truncf %102 : vector<8x32xf32> to vector<8x32xbf16>
    %c0_35 = arith.constant 0 : index
    %c0_36 = arith.constant 0 : index
    %111 = vector.load %arg2[%c0_35, %c0_36] : memref<32x128xbf16, #tpu.memory_space<vmem>>, vector<32x128xbf16>
    %cst_37 = arith.constant dense<0.000000e+00> : vector<8x128xf32>
    %112 = tpu.matmul %110, %111, %cst_37 {dimension_numbers = #tpu.dot_dimension_numbers<[1], [0], [0], [1], [0, 0, 1, 1], [], []>} : vector<8x32xbf16>, vector<32x128xbf16>, vector<8x128xf32> -> vector<8x128xf32>
    %113 = arith.addf %109, %112 : vector<8x128xf32>
    %114 = arith.negf %113 : vector<8x128xf32>
    %115 = math.exp %114 : vector<8x128xf32>
    %cst_38 = arith.constant 1.000000e+00 : f32
    %116 = vector.broadcast %cst_38 : f32 to vector<8x128xf32>
    %117 = arith.addf %116, %115 : vector<8x128xf32>
    %118 = arith.divf %116, %117 : vector<8x128xf32>
    %119 = arith.mulf %118, %10 : vector<8x128xf32>
    %120 = arith.addf %119, %15 : vector<8x128xf32>
    %121 = vector.extract_strided_slice %120 {offsets = [0, 0], sizes = [8, 32], strides = [1, 1]} : vector<8x128xf32> to vector<8x32xf32>
    %122 = vector.extract_strided_slice %120 {offsets = [0, 32], sizes = [8, 32], strides = [1, 1]} : vector<8x128xf32> to vector<8x32xf32>
    %123 = vector.extract_strided_slice %120 {offsets = [0, 64], sizes = [8, 32], strides = [1, 1]} : vector<8x128xf32> to vector<8x32xf32>
    %124 = vector.extract_strided_slice %120 {offsets = [0, 96], sizes = [8, 32], strides = [1, 1]} : vector<8x128xf32> to vector<8x32xf32>
    %125 = arith.mulf %122, %100 : vector<8x32xf32>
    %126 = arith.mulf %121, %123 : vector<8x32xf32>
    %127 = arith.addf %125, %126 : vector<8x32xf32>
    %128 = math.tanh %127 : vector<8x32xf32>
    %129 = arith.mulf %124, %128 : vector<8x32xf32>
    %130 = arith.truncf %129 : vector<8x32xf32> to vector<8x32xbf16>
    %131 = arith.index_cast %107 : i32 to index
    %c0_39 = arith.constant 0 : index
    %132 = vector.load %arg12[%131, %c0_39] : memref<64x32xbf16, #tpu.memory_space<vmem>>, vector<8x32xbf16>
    tpu.vector_store %arg12[%131, %c0_39], %130 {strides = array<i32>} : memref<64x32xbf16, #tpu.memory_space<vmem>>, vector<8x32xbf16>,
    %c4_i32 = arith.constant 4 : i32
    %c8_i32_40 = arith.constant 8 : i32
    %133 = arith.muli %c4_i32, %c8_i32_40 : i32
    %134 = tpu.assume_multiple %133, 8 : i32
    %135 = arith.index_cast %134 : i32 to index
    %c0_41 = arith.constant 0 : index
    %136 = vector.load %arg13[%135, %c0_41] : memref<64x128xf32, #tpu.memory_space<vmem>>, vector<8x128xf32>
    %137 = arith.truncf %129 : vector<8x32xf32> to vector<8x32xbf16>
    %c0_42 = arith.constant 0 : index
    %c0_43 = arith.constant 0 : index
    %138 = vector.load %arg2[%c0_42, %c0_43] : memref<32x128xbf16, #tpu.memory_space<vmem>>, vector<32x128xbf16>
    %cst_44 = arith.constant dense<0.000000e+00> : vector<8x128xf32>
    %139 = tpu.matmul %137, %138, %cst_44 {dimension_numbers = #tpu.dot_dimension_numbers<[1], [0], [0], [1], [0, 0, 1, 1], [], []>} : vector<8x32xbf16>, vector<32x128xbf16>, vector<8x128xf32> -> vector<8x128xf32>
    %140 = arith.addf %136, %139 : vector<8x128xf32>
    %141 = arith.negf %140 : vector<8x128xf32>
    %142 = math.exp %141 : vector<8x128xf32>
    %cst_45 = arith.constant 1.000000e+00 : f32
    %143 = vector.broadcast %cst_45 : f32 to vector<8x128xf32>
    %144 = arith.addf %143, %142 : vector<8x128xf32>
    %145 = arith.divf %143, %144 : vector<8x128xf32>
    %146 = arith.mulf %145, %10 : vector<8x128xf32>
    %147 = arith.addf %146, %15 : vector<8x128xf32>
    %148 = vector.extract_strided_slice %147 {offsets = [0, 0], sizes = [8, 32], strides = [1, 1]} : vector<8x128xf32> to vector<8x32xf32>
    %149 = vector.extract_strided_slice %147 {offsets = [0, 32], sizes = [8, 32], strides = [1, 1]} : vector<8x128xf32> to vector<8x32xf32>
    %150 = vector.extract_strided_slice %147 {offsets = [0, 64], sizes = [8, 32], strides = [1, 1]} : vector<8x128xf32> to vector<8x32xf32>
    %151 = vector.extract_strided_slice %147 {offsets = [0, 96], sizes = [8, 32], strides = [1, 1]} : vector<8x128xf32> to vector<8x32xf32>
    %152 = arith.mulf %149, %127 : vector<8x32xf32>
    %153 = arith.mulf %148, %150 : vector<8x32xf32>
    %154 = arith.addf %152, %153 : vector<8x32xf32>
    %155 = math.tanh %154 : vector<8x32xf32>
    %156 = arith.mulf %151, %155 : vector<8x32xf32>
    %157 = arith.truncf %156 : vector<8x32xf32> to vector<8x32xbf16>
    %158 = arith.index_cast %134 : i32 to index
    %c0_46 = arith.constant 0 : index
    %159 = vector.load %arg12[%158, %c0_46] : memref<64x32xbf16, #tpu.memory_space<vmem>>, vector<8x32xbf16>
    tpu.vector_store %arg12[%158, %c0_46], %157 {strides = array<i32>} : memref<64x32xbf16, #tpu.memory_space<vmem>>, vector<8x32xbf16>,
    %c5_i32 = arith.constant 5 : i32
    %c8_i32_47 = arith.constant 8 : i32
    %160 = arith.muli %c5_i32, %c8_i32_47 : i32
    %161 = tpu.assume_multiple %160, 8 : i32
    %162 = arith.index_cast %161 : i32 to index
    %c0_48 = arith.constant 0 : index
    %163 = vector.load %arg13[%162, %c0_48] : memref<64x128xf32, #tpu.memory_space<vmem>>, vector<8x128xf32>
    %164 = arith.truncf %156 : vector<8x32xf32> to vector<8x32xbf16>
    %c0_49 = arith.constant 0 : index
    %c0_50 = arith.constant 0 : index
    %165 = vector.load %arg2[%c0_49, %c0_50] : memref<32x128xbf16, #tpu.memory_space<vmem>>, vector<32x128xbf16>
    %cst_51 = arith.constant dense<0.000000e+00> : vector<8x128xf32>
    %166 = tpu.matmul %164, %165, %cst_51 {dimension_numbers = #tpu.dot_dimension_numbers<[1], [0], [0], [1], [0, 0, 1, 1], [], []>} : vector<8x32xbf16>, vector<32x128xbf16>, vector<8x128xf32> -> vector<8x128xf32>
    %167 = arith.addf %163, %166 : vector<8x128xf32>
    %168 = arith.negf %167 : vector<8x128xf32>
    %169 = math.exp %168 : vector<8x128xf32>
    %cst_52 = arith.constant 1.000000e+00 : f32
    %170 = vector.broadcast %cst_52 : f32 to vector<8x128xf32>
    %171 = arith.addf %170, %169 : vector<8x128xf32>
    %172 = arith.divf %170, %171 : vector<8x128xf32>
    %173 = arith.mulf %172, %10 : vector<8x128xf32>
    %174 = arith.addf %173, %15 : vector<8x128xf32>
    %175 = vector.extract_strided_slice %174 {offsets = [0, 0], sizes = [8, 32], strides = [1, 1]} : vector<8x128xf32> to vector<8x32xf32>
    %176 = vector.extract_strided_slice %174 {offsets = [0, 32], sizes = [8, 32], strides = [1, 1]} : vector<8x128xf32> to vector<8x32xf32>
    %177 = vector.extract_strided_slice %174 {offsets = [0, 64], sizes = [8, 32], strides = [1, 1]} : vector<8x128xf32> to vector<8x32xf32>
    %178 = vector.extract_strided_slice %174 {offsets = [0, 96], sizes = [8, 32], strides = [1, 1]} : vector<8x128xf32> to vector<8x32xf32>
    %179 = arith.mulf %176, %154 : vector<8x32xf32>
    %180 = arith.mulf %175, %177 : vector<8x32xf32>
    %181 = arith.addf %179, %180 : vector<8x32xf32>
    %182 = math.tanh %181 : vector<8x32xf32>
    %183 = arith.mulf %178, %182 : vector<8x32xf32>
    %184 = arith.truncf %183 : vector<8x32xf32> to vector<8x32xbf16>
    %185 = arith.index_cast %161 : i32 to index
    %c0_53 = arith.constant 0 : index
    %186 = vector.load %arg12[%185, %c0_53] : memref<64x32xbf16, #tpu.memory_space<vmem>>, vector<8x32xbf16>
    tpu.vector_store %arg12[%185, %c0_53], %184 {strides = array<i32>} : memref<64x32xbf16, #tpu.memory_space<vmem>>, vector<8x32xbf16>,
    %c6_i32 = arith.constant 6 : i32
    %c8_i32_54 = arith.constant 8 : i32
    %187 = arith.muli %c6_i32, %c8_i32_54 : i32
    %188 = tpu.assume_multiple %187, 8 : i32
    %189 = arith.index_cast %188 : i32 to index
    %c0_55 = arith.constant 0 : index
    %190 = vector.load %arg13[%189, %c0_55] : memref<64x128xf32, #tpu.memory_space<vmem>>, vector<8x128xf32>
    %191 = arith.truncf %183 : vector<8x32xf32> to vector<8x32xbf16>
    %c0_56 = arith.constant 0 : index
    %c0_57 = arith.constant 0 : index
    %192 = vector.load %arg2[%c0_56, %c0_57] : memref<32x128xbf16, #tpu.memory_space<vmem>>, vector<32x128xbf16>
    %cst_58 = arith.constant dense<0.000000e+00> : vector<8x128xf32>
    %193 = tpu.matmul %191, %192, %cst_58 {dimension_numbers = #tpu.dot_dimension_numbers<[1], [0], [0], [1], [0, 0, 1, 1], [], []>} : vector<8x32xbf16>, vector<32x128xbf16>, vector<8x128xf32> -> vector<8x128xf32>
    %194 = arith.addf %190, %193 : vector<8x128xf32>
    %195 = arith.negf %194 : vector<8x128xf32>
    %196 = math.exp %195 : vector<8x128xf32>
    %cst_59 = arith.constant 1.000000e+00 : f32
    %197 = vector.broadcast %cst_59 : f32 to vector<8x128xf32>
    %198 = arith.addf %197, %196 : vector<8x128xf32>
    %199 = arith.divf %197, %198 : vector<8x128xf32>
    %200 = arith.mulf %199, %10 : vector<8x128xf32>
    %201 = arith.addf %200, %15 : vector<8x128xf32>
    %202 = vector.extract_strided_slice %201 {offsets = [0, 0], sizes = [8, 32], strides = [1, 1]} : vector<8x128xf32> to vector<8x32xf32>
    %203 = vector.extract_strided_slice %201 {offsets = [0, 32], sizes = [8, 32], strides = [1, 1]} : vector<8x128xf32> to vector<8x32xf32>
    %204 = vector.extract_strided_slice %201 {offsets = [0, 64], sizes = [8, 32], strides = [1, 1]} : vector<8x128xf32> to vector<8x32xf32>
    %205 = vector.extract_strided_slice %201 {offsets = [0, 96], sizes = [8, 32], strides = [1, 1]} : vector<8x128xf32> to vector<8x32xf32>
    %206 = arith.mulf %203, %181 : vector<8x32xf32>
    %207 = arith.mulf %202, %204 : vector<8x32xf32>
    %208 = arith.addf %206, %207 : vector<8x32xf32>
    %209 = math.tanh %208 : vector<8x32xf32>
    %210 = arith.mulf %205, %209 : vector<8x32xf32>
    %211 = arith.truncf %210 : vector<8x32xf32> to vector<8x32xbf16>
    %212 = arith.index_cast %188 : i32 to index
    %c0_60 = arith.constant 0 : index
    %213 = vector.load %arg12[%212, %c0_60] : memref<64x32xbf16, #tpu.memory_space<vmem>>, vector<8x32xbf16>
    tpu.vector_store %arg12[%212, %c0_60], %211 {strides = array<i32>} : memref<64x32xbf16, #tpu.memory_space<vmem>>, vector<8x32xbf16>,
    %c7_i32 = arith.constant 7 : i32
    %c8_i32_61 = arith.constant 8 : i32
    %214 = arith.muli %c7_i32, %c8_i32_61 : i32
    %215 = tpu.assume_multiple %214, 8 : i32
    %216 = arith.index_cast %215 : i32 to index
    %c0_62 = arith.constant 0 : index
    %217 = vector.load %arg13[%216, %c0_62] : memref<64x128xf32, #tpu.memory_space<vmem>>, vector<8x128xf32>
    %218 = arith.truncf %210 : vector<8x32xf32> to vector<8x32xbf16>
    %c0_63 = arith.constant 0 : index
    %c0_64 = arith.constant 0 : index
    %219 = vector.load %arg2[%c0_63, %c0_64] : memref<32x128xbf16, #tpu.memory_space<vmem>>, vector<32x128xbf16>
    %cst_65 = arith.constant dense<0.000000e+00> : vector<8x128xf32>
    %220 = tpu.matmul %218, %219, %cst_65 {dimension_numbers = #tpu.dot_dimension_numbers<[1], [0], [0], [1], [0, 0, 1, 1], [], []>} : vector<8x32xbf16>, vector<32x128xbf16>, vector<8x128xf32> -> vector<8x128xf32>
    %221 = arith.addf %217, %220 : vector<8x128xf32>
    %222 = arith.negf %221 : vector<8x128xf32>
    %223 = math.exp %222 : vector<8x128xf32>
    %cst_66 = arith.constant 1.000000e+00 : f32
    %224 = vector.broadcast %cst_66 : f32 to vector<8x128xf32>
    %225 = arith.addf %224, %223 : vector<8x128xf32>
    %226 = arith.divf %224, %225 : vector<8x128xf32>
    %227 = arith.mulf %226, %10 : vector<8x128xf32>
    %228 = arith.addf %227, %15 : vector<8x128xf32>
    %229 = vector.extract_strided_slice %228 {offsets = [0, 0], sizes = [8, 32], strides = [1, 1]} : vector<8x128xf32> to vector<8x32xf32>
    %230 = vector.extract_strided_slice %228 {offsets = [0, 32], sizes = [8, 32], strides = [1, 1]} : vector<8x128xf32> to vector<8x32xf32>
    %231 = vector.extract_strided_slice %228 {offsets = [0, 64], sizes = [8, 32], strides = [1, 1]} : vector<8x128xf32> to vector<8x32xf32>
    %232 = vector.extract_strided_slice %228 {offsets = [0, 96], sizes = [8, 32], strides = [1, 1]} : vector<8x128xf32> to vector<8x32xf32>
    %233 = arith.mulf %230, %208 : vector<8x32xf32>
    %234 = arith.mulf %229, %231 : vector<8x32xf32>
    %235 = arith.addf %233, %234 : vector<8x32xf32>
    %236 = math.tanh %235 : vector<8x32xf32>
    %237 = arith.mulf %232, %236 : vector<8x32xf32>
    %238 = arith.truncf %237 : vector<8x32xf32> to vector<8x32xbf16>
    %239 = arith.index_cast %215 : i32 to index
    %c0_67 = arith.constant 0 : index
    %240 = vector.load %arg12[%239, %c0_67] : memref<64x32xbf16, #tpu.memory_space<vmem>>, vector<8x32xbf16>
    tpu.vector_store %arg12[%239, %c0_67], %238 {strides = array<i32>} : memref<64x32xbf16, #tpu.memory_space<vmem>>, vector<8x32xbf16>,
    %c8_i32_68 = arith.constant 8 : i32
    %c0_69 = arith.constant 0 : index
    %c0_70 = arith.constant 0 : index
    %241 = vector.load %arg12[%c0_69, %c0_70] : memref<64x32xbf16, #tpu.memory_space<vmem>>, vector<64x32xbf16>
    %c0_71 = arith.constant 0 : index
    %c0_72 = arith.constant 0 : index
    %242 = vector.load %arg4[%c0_71, %c0_72] : memref<32x128xbf16, #tpu.memory_space<vmem>>, vector<32x128xbf16>
    %cst_73 = arith.constant dense<0.000000e+00> : vector<64x128xf32>
    %243 = tpu.matmul %241, %242, %cst_73 {dimension_numbers = #tpu.dot_dimension_numbers<[1], [0], [0], [1], [0, 0, 1, 1], [], []>} : vector<64x32xbf16>, vector<32x128xbf16>, vector<64x128xf32> -> vector<64x128xf32>
    %c0_74 = arith.constant 0 : index
    %c0_75 = arith.constant 0 : index
    %244 = vector.load %arg6[%c0_74, %c0_75] : memref<1x128xf32, #tpu.memory_space<vmem>>, vector<1x128xf32>
    %245 = vector.broadcast %244 : vector<1x128xf32> to vector<64x128xf32>
    %246 = arith.addf %243, %245 : vector<64x128xf32>
    %c0_76 = arith.constant 0 : index
    %c0_77 = arith.constant 0 : index
    %247 = vector.load %arg13[%c0_76, %c0_77] : memref<64x128xf32, #tpu.memory_space<vmem>>, vector<64x128xf32>
    tpu.vector_store %arg13[%c0_76, %c0_77], %246 {strides = array<i32>} : memref<64x128xf32, #tpu.memory_space<vmem>>, vector<64x128xf32>,
    %cst_78 = arith.constant 0.000000e+00 : f32
    %248 = vector.broadcast %cst_78 : f32 to vector<8x32xf32>
    %cst_79 = arith.constant 0.000000e+00 : f32
    %249 = vector.broadcast %cst_79 : f32 to vector<8x32xf32>
    %c0_i32_80 = arith.constant 0 : i32
    %c8_i32_81 = arith.constant 8 : i32
    %250 = arith.muli %c0_i32_80, %c8_i32_81 : i32
    %251 = tpu.assume_multiple %250, 8 : i32
    %252 = arith.index_cast %251 : i32 to index
    %c0_82 = arith.constant 0 : index
    %253 = vector.load %arg13[%252, %c0_82] : memref<64x128xf32, #tpu.memory_space<vmem>>, vector<8x128xf32>
    %254 = arith.truncf %248 : vector<8x32xf32> to vector<8x32xbf16>
    %c0_83 = arith.constant 0 : index
    %c0_84 = arith.constant 0 : index
    %255 = vector.load %arg5[%c0_83, %c0_84] : memref<32x128xbf16, #tpu.memory_space<vmem>>, vector<32x128xbf16>
    %cst_85 = arith.constant dense<0.000000e+00> : vector<8x128xf32>
    %256 = tpu.matmul %254, %255, %cst_85 {dimension_numbers = #tpu.dot_dimension_numbers<[1], [0], [0], [1], [0, 0, 1, 1], [], []>} : vector<8x32xbf16>, vector<32x128xbf16>, vector<8x128xf32> -> vector<8x128xf32>
    %257 = arith.addf %253, %256 : vector<8x128xf32>
    %258 = arith.negf %257 : vector<8x128xf32>
    %259 = math.exp %258 : vector<8x128xf32>
    %cst_86 = arith.constant 1.000000e+00 : f32
    %260 = vector.broadcast %cst_86 : f32 to vector<8x128xf32>
    %261 = arith.addf %260, %259 : vector<8x128xf32>
    %262 = arith.divf %260, %261 : vector<8x128xf32>
    %263 = arith.mulf %262, %10 : vector<8x128xf32>
    %264 = arith.addf %263, %15 : vector<8x128xf32>
    %265 = vector.extract_strided_slice %264 {offsets = [0, 0], sizes = [8, 32], strides = [1, 1]} : vector<8x128xf32> to vector<8x32xf32>
    %266 = vector.extract_strided_slice %264 {offsets = [0, 32], sizes = [8, 32], strides = [1, 1]} : vector<8x128xf32> to vector<8x32xf32>
    %267 = vector.extract_strided_slice %264 {offsets = [0, 64], sizes = [8, 32], strides = [1, 1]} : vector<8x128xf32> to vector<8x32xf32>
    %268 = vector.extract_strided_slice %264 {offsets = [0, 96], sizes = [8, 32], strides = [1, 1]} : vector<8x128xf32> to vector<8x32xf32>
    %269 = arith.mulf %266, %249 : vector<8x32xf32>
    %270 = arith.mulf %265, %267 : vector<8x32xf32>
    %271 = arith.addf %269, %270 : vector<8x32xf32>
    %272 = math.tanh %271 : vector<8x32xf32>
    %273 = arith.mulf %268, %272 : vector<8x32xf32>
    %c1_i32_87 = arith.constant 1 : i32
    %c8_i32_88 = arith.constant 8 : i32
    %274 = arith.muli %c1_i32_87, %c8_i32_88 : i32
    %275 = tpu.assume_multiple %274, 8 : i32
    %276 = arith.index_cast %275 : i32 to index
    %c0_89 = arith.constant 0 : index
    %277 = vector.load %arg13[%276, %c0_89] : memref<64x128xf32, #tpu.memory_space<vmem>>, vector<8x128xf32>
    %278 = arith.truncf %273 : vector<8x32xf32> to vector<8x32xbf16>
    %c0_90 = arith.constant 0 : index
    %c0_91 = arith.constant 0 : index
    %279 = vector.load %arg5[%c0_90, %c0_91] : memref<32x128xbf16, #tpu.memory_space<vmem>>, vector<32x128xbf16>
    %cst_92 = arith.constant dense<0.000000e+00> : vector<8x128xf32>
    %280 = tpu.matmul %278, %279, %cst_92 {dimension_numbers = #tpu.dot_dimension_numbers<[1], [0], [0], [1], [0, 0, 1, 1], [], []>} : vector<8x32xbf16>, vector<32x128xbf16>, vector<8x128xf32> -> vector<8x128xf32>
    %281 = arith.addf %277, %280 : vector<8x128xf32>
    %282 = arith.negf %281 : vector<8x128xf32>
    %283 = math.exp %282 : vector<8x128xf32>
    %cst_93 = arith.constant 1.000000e+00 : f32
    %284 = vector.broadcast %cst_93 : f32 to vector<8x128xf32>
    %285 = arith.addf %284, %283 : vector<8x128xf32>
    %286 = arith.divf %284, %285 : vector<8x128xf32>
    %287 = arith.mulf %286, %10 : vector<8x128xf32>
    %288 = arith.addf %287, %15 : vector<8x128xf32>
    %289 = vector.extract_strided_slice %288 {offsets = [0, 0], sizes = [8, 32], strides = [1, 1]} : vector<8x128xf32> to vector<8x32xf32>
    %290 = vector.extract_strided_slice %288 {offsets = [0, 32], sizes = [8, 32], strides = [1, 1]} : vector<8x128xf32> to vector<8x32xf32>
    %291 = vector.extract_strided_slice %288 {offsets = [0, 64], sizes = [8, 32], strides = [1, 1]} : vector<8x128xf32> to vector<8x32xf32>
    %292 = vector.extract_strided_slice %288 {offsets = [0, 96], sizes = [8, 32], strides = [1, 1]} : vector<8x128xf32> to vector<8x32xf32>
    %293 = arith.mulf %290, %271 : vector<8x32xf32>
    %294 = arith.mulf %289, %291 : vector<8x32xf32>
    %295 = arith.addf %293, %294 : vector<8x32xf32>
    %296 = math.tanh %295 : vector<8x32xf32>
    %297 = arith.mulf %292, %296 : vector<8x32xf32>
    %c2_i32_94 = arith.constant 2 : i32
    %c8_i32_95 = arith.constant 8 : i32
    %298 = arith.muli %c2_i32_94, %c8_i32_95 : i32
    %299 = tpu.assume_multiple %298, 8 : i32
    %300 = arith.index_cast %299 : i32 to index
    %c0_96 = arith.constant 0 : index
    %301 = vector.load %arg13[%300, %c0_96] : memref<64x128xf32, #tpu.memory_space<vmem>>, vector<8x128xf32>
    %302 = arith.truncf %297 : vector<8x32xf32> to vector<8x32xbf16>
    %c0_97 = arith.constant 0 : index
    %c0_98 = arith.constant 0 : index
    %303 = vector.load %arg5[%c0_97, %c0_98] : memref<32x128xbf16, #tpu.memory_space<vmem>>, vector<32x128xbf16>
    %cst_99 = arith.constant dense<0.000000e+00> : vector<8x128xf32>
    %304 = tpu.matmul %302, %303, %cst_99 {dimension_numbers = #tpu.dot_dimension_numbers<[1], [0], [0], [1], [0, 0, 1, 1], [], []>} : vector<8x32xbf16>, vector<32x128xbf16>, vector<8x128xf32> -> vector<8x128xf32>
    %305 = arith.addf %301, %304 : vector<8x128xf32>
    %306 = arith.negf %305 : vector<8x128xf32>
    %307 = math.exp %306 : vector<8x128xf32>
    %cst_100 = arith.constant 1.000000e+00 : f32
    %308 = vector.broadcast %cst_100 : f32 to vector<8x128xf32>
    %309 = arith.addf %308, %307 : vector<8x128xf32>
    %310 = arith.divf %308, %309 : vector<8x128xf32>
    %311 = arith.mulf %310, %10 : vector<8x128xf32>
    %312 = arith.addf %311, %15 : vector<8x128xf32>
    %313 = vector.extract_strided_slice %312 {offsets = [0, 0], sizes = [8, 32], strides = [1, 1]} : vector<8x128xf32> to vector<8x32xf32>
    %314 = vector.extract_strided_slice %312 {offsets = [0, 32], sizes = [8, 32], strides = [1, 1]} : vector<8x128xf32> to vector<8x32xf32>
    %315 = vector.extract_strided_slice %312 {offsets = [0, 64], sizes = [8, 32], strides = [1, 1]} : vector<8x128xf32> to vector<8x32xf32>
    %316 = vector.extract_strided_slice %312 {offsets = [0, 96], sizes = [8, 32], strides = [1, 1]} : vector<8x128xf32> to vector<8x32xf32>
    %317 = arith.mulf %314, %295 : vector<8x32xf32>
    %318 = arith.mulf %313, %315 : vector<8x32xf32>
    %319 = arith.addf %317, %318 : vector<8x32xf32>
    %320 = math.tanh %319 : vector<8x32xf32>
    %321 = arith.mulf %316, %320 : vector<8x32xf32>
    %c3_i32_101 = arith.constant 3 : i32
    %c8_i32_102 = arith.constant 8 : i32
    %322 = arith.muli %c3_i32_101, %c8_i32_102 : i32
    %323 = tpu.assume_multiple %322, 8 : i32
    %324 = arith.index_cast %323 : i32 to index
    %c0_103 = arith.constant 0 : index
    %325 = vector.load %arg13[%324, %c0_103] : memref<64x128xf32, #tpu.memory_space<vmem>>, vector<8x128xf32>
    %326 = arith.truncf %321 : vector<8x32xf32> to vector<8x32xbf16>
    %c0_104 = arith.constant 0 : index
    %c0_105 = arith.constant 0 : index
    %327 = vector.load %arg5[%c0_104, %c0_105] : memref<32x128xbf16, #tpu.memory_space<vmem>>, vector<32x128xbf16>
    %cst_106 = arith.constant dense<0.000000e+00> : vector<8x128xf32>
    %328 = tpu.matmul %326, %327, %cst_106 {dimension_numbers = #tpu.dot_dimension_numbers<[1], [0], [0], [1], [0, 0, 1, 1], [], []>} : vector<8x32xbf16>, vector<32x128xbf16>, vector<8x128xf32> -> vector<8x128xf32>
    %329 = arith.addf %325, %328 : vector<8x128xf32>
    %330 = arith.negf %329 : vector<8x128xf32>
    %331 = math.exp %330 : vector<8x128xf32>
    %cst_107 = arith.constant 1.000000e+00 : f32
    %332 = vector.broadcast %cst_107 : f32 to vector<8x128xf32>
    %333 = arith.addf %332, %331 : vector<8x128xf32>
    %334 = arith.divf %332, %333 : vector<8x128xf32>
    %335 = arith.mulf %334, %10 : vector<8x128xf32>
    %336 = arith.addf %335, %15 : vector<8x128xf32>
    %337 = vector.extract_strided_slice %336 {offsets = [0, 0], sizes = [8, 32], strides = [1, 1]} : vector<8x128xf32> to vector<8x32xf32>
    %338 = vector.extract_strided_slice %336 {offsets = [0, 32], sizes = [8, 32], strides = [1, 1]} : vector<8x128xf32> to vector<8x32xf32>
    %339 = vector.extract_strided_slice %336 {offsets = [0, 64], sizes = [8, 32], strides = [1, 1]} : vector<8x128xf32> to vector<8x32xf32>
    %340 = vector.extract_strided_slice %336 {offsets = [0, 96], sizes = [8, 32], strides = [1, 1]} : vector<8x128xf32> to vector<8x32xf32>
    %341 = arith.mulf %338, %319 : vector<8x32xf32>
    %342 = arith.mulf %337, %339 : vector<8x32xf32>
    %343 = arith.addf %341, %342 : vector<8x32xf32>
    %344 = math.tanh %343 : vector<8x32xf32>
    %345 = arith.mulf %340, %344 : vector<8x32xf32>
    %c4_i32_108 = arith.constant 4 : i32
    %c8_i32_109 = arith.constant 8 : i32
    %346 = arith.muli %c4_i32_108, %c8_i32_109 : i32
    %347 = tpu.assume_multiple %346, 8 : i32
    %348 = arith.index_cast %347 : i32 to index
    %c0_110 = arith.constant 0 : index
    %349 = vector.load %arg13[%348, %c0_110] : memref<64x128xf32, #tpu.memory_space<vmem>>, vector<8x128xf32>
    %350 = arith.truncf %345 : vector<8x32xf32> to vector<8x32xbf16>
    %c0_111 = arith.constant 0 : index
    %c0_112 = arith.constant 0 : index
    %351 = vector.load %arg5[%c0_111, %c0_112] : memref<32x128xbf16, #tpu.memory_space<vmem>>, vector<32x128xbf16>
    %cst_113 = arith.constant dense<0.000000e+00> : vector<8x128xf32>
    %352 = tpu.matmul %350, %351, %cst_113 {dimension_numbers = #tpu.dot_dimension_numbers<[1], [0], [0], [1], [0, 0, 1, 1], [], []>} : vector<8x32xbf16>, vector<32x128xbf16>, vector<8x128xf32> -> vector<8x128xf32>
    %353 = arith.addf %349, %352 : vector<8x128xf32>
    %354 = arith.negf %353 : vector<8x128xf32>
    %355 = math.exp %354 : vector<8x128xf32>
    %cst_114 = arith.constant 1.000000e+00 : f32
    %356 = vector.broadcast %cst_114 : f32 to vector<8x128xf32>
    %357 = arith.addf %356, %355 : vector<8x128xf32>
    %358 = arith.divf %356, %357 : vector<8x128xf32>
    %359 = arith.mulf %358, %10 : vector<8x128xf32>
    %360 = arith.addf %359, %15 : vector<8x128xf32>
    %361 = vector.extract_strided_slice %360 {offsets = [0, 0], sizes = [8, 32], strides = [1, 1]} : vector<8x128xf32> to vector<8x32xf32>
    %362 = vector.extract_strided_slice %360 {offsets = [0, 32], sizes = [8, 32], strides = [1, 1]} : vector<8x128xf32> to vector<8x32xf32>
    %363 = vector.extract_strided_slice %360 {offsets = [0, 64], sizes = [8, 32], strides = [1, 1]} : vector<8x128xf32> to vector<8x32xf32>
    %364 = vector.extract_strided_slice %360 {offsets = [0, 96], sizes = [8, 32], strides = [1, 1]} : vector<8x128xf32> to vector<8x32xf32>
    %365 = arith.mulf %362, %343 : vector<8x32xf32>
    %366 = arith.mulf %361, %363 : vector<8x32xf32>
    %367 = arith.addf %365, %366 : vector<8x32xf32>
    %368 = math.tanh %367 : vector<8x32xf32>
    %369 = arith.mulf %364, %368 : vector<8x32xf32>
    %c5_i32_115 = arith.constant 5 : i32
    %c8_i32_116 = arith.constant 8 : i32
    %370 = arith.muli %c5_i32_115, %c8_i32_116 : i32
    %371 = tpu.assume_multiple %370, 8 : i32
    %372 = arith.index_cast %371 : i32 to index
    %c0_117 = arith.constant 0 : index
    %373 = vector.load %arg13[%372, %c0_117] : memref<64x128xf32, #tpu.memory_space<vmem>>, vector<8x128xf32>
    %374 = arith.truncf %369 : vector<8x32xf32> to vector<8x32xbf16>
    %c0_118 = arith.constant 0 : index
    %c0_119 = arith.constant 0 : index
    %375 = vector.load %arg5[%c0_118, %c0_119] : memref<32x128xbf16, #tpu.memory_space<vmem>>, vector<32x128xbf16>
    %cst_120 = arith.constant dense<0.000000e+00> : vector<8x128xf32>
    %376 = tpu.matmul %374, %375, %cst_120 {dimension_numbers = #tpu.dot_dimension_numbers<[1], [0], [0], [1], [0, 0, 1, 1], [], []>} : vector<8x32xbf16>, vector<32x128xbf16>, vector<8x128xf32> -> vector<8x128xf32>
    %377 = arith.addf %373, %376 : vector<8x128xf32>
    %378 = arith.negf %377 : vector<8x128xf32>
    %379 = math.exp %378 : vector<8x128xf32>
    %cst_121 = arith.constant 1.000000e+00 : f32
    %380 = vector.broadcast %cst_121 : f32 to vector<8x128xf32>
    %381 = arith.addf %380, %379 : vector<8x128xf32>
    %382 = arith.divf %380, %381 : vector<8x128xf32>
    %383 = arith.mulf %382, %10 : vector<8x128xf32>
    %384 = arith.addf %383, %15 : vector<8x128xf32>
    %385 = vector.extract_strided_slice %384 {offsets = [0, 0], sizes = [8, 32], strides = [1, 1]} : vector<8x128xf32> to vector<8x32xf32>
    %386 = vector.extract_strided_slice %384 {offsets = [0, 32], sizes = [8, 32], strides = [1, 1]} : vector<8x128xf32> to vector<8x32xf32>
    %387 = vector.extract_strided_slice %384 {offsets = [0, 64], sizes = [8, 32], strides = [1, 1]} : vector<8x128xf32> to vector<8x32xf32>
    %388 = vector.extract_strided_slice %384 {offsets = [0, 96], sizes = [8, 32], strides = [1, 1]} : vector<8x128xf32> to vector<8x32xf32>
    %389 = arith.mulf %386, %367 : vector<8x32xf32>
    %390 = arith.mulf %385, %387 : vector<8x32xf32>
    %391 = arith.addf %389, %390 : vector<8x32xf32>
    %392 = math.tanh %391 : vector<8x32xf32>
    %393 = arith.mulf %388, %392 : vector<8x32xf32>
    %c6_i32_122 = arith.constant 6 : i32
    %c8_i32_123 = arith.constant 8 : i32
    %394 = arith.muli %c6_i32_122, %c8_i32_123 : i32
    %395 = tpu.assume_multiple %394, 8 : i32
    %396 = arith.index_cast %395 : i32 to index
    %c0_124 = arith.constant 0 : index
    %397 = vector.load %arg13[%396, %c0_124] : memref<64x128xf32, #tpu.memory_space<vmem>>, vector<8x128xf32>
    %398 = arith.truncf %393 : vector<8x32xf32> to vector<8x32xbf16>
    %c0_125 = arith.constant 0 : index
    %c0_126 = arith.constant 0 : index
    %399 = vector.load %arg5[%c0_125, %c0_126] : memref<32x128xbf16, #tpu.memory_space<vmem>>, vector<32x128xbf16>
    %cst_127 = arith.constant dense<0.000000e+00> : vector<8x128xf32>
    %400 = tpu.matmul %398, %399, %cst_127 {dimension_numbers = #tpu.dot_dimension_numbers<[1], [0], [0], [1], [0, 0, 1, 1], [], []>} : vector<8x32xbf16>, vector<32x128xbf16>, vector<8x128xf32> -> vector<8x128xf32>
    %401 = arith.addf %397, %400 : vector<8x128xf32>
    %402 = arith.negf %401 : vector<8x128xf32>
    %403 = math.exp %402 : vector<8x128xf32>
    %cst_128 = arith.constant 1.000000e+00 : f32
    %404 = vector.broadcast %cst_128 : f32 to vector<8x128xf32>
    %405 = arith.addf %404, %403 : vector<8x128xf32>
    %406 = arith.divf %404, %405 : vector<8x128xf32>
    %407 = arith.mulf %406, %10 : vector<8x128xf32>
    %408 = arith.addf %407, %15 : vector<8x128xf32>
    %409 = vector.extract_strided_slice %408 {offsets = [0, 0], sizes = [8, 32], strides = [1, 1]} : vector<8x128xf32> to vector<8x32xf32>
    %410 = vector.extract_strided_slice %408 {offsets = [0, 32], sizes = [8, 32], strides = [1, 1]} : vector<8x128xf32> to vector<8x32xf32>
    %411 = vector.extract_strided_slice %408 {offsets = [0, 64], sizes = [8, 32], strides = [1, 1]} : vector<8x128xf32> to vector<8x32xf32>
    %412 = vector.extract_strided_slice %408 {offsets = [0, 96], sizes = [8, 32], strides = [1, 1]} : vector<8x128xf32> to vector<8x32xf32>
    %413 = arith.mulf %410, %391 : vector<8x32xf32>
    %414 = arith.mulf %409, %411 : vector<8x32xf32>
    %415 = arith.addf %413, %414 : vector<8x32xf32>
    %416 = math.tanh %415 : vector<8x32xf32>
    %417 = arith.mulf %412, %416 : vector<8x32xf32>
    %c7_i32_129 = arith.constant 7 : i32
    %c8_i32_130 = arith.constant 8 : i32
    %418 = arith.muli %c7_i32_129, %c8_i32_130 : i32
    %419 = tpu.assume_multiple %418, 8 : i32
    %420 = arith.index_cast %419 : i32 to index
    %c0_131 = arith.constant 0 : index
    %421 = vector.load %arg13[%420, %c0_131] : memref<64x128xf32, #tpu.memory_space<vmem>>, vector<8x128xf32>
    %422 = arith.truncf %417 : vector<8x32xf32> to vector<8x32xbf16>
    %c0_132 = arith.constant 0 : index
    %c0_133 = arith.constant 0 : index
    %423 = vector.load %arg5[%c0_132, %c0_133] : memref<32x128xbf16, #tpu.memory_space<vmem>>, vector<32x128xbf16>
    %cst_134 = arith.constant dense<0.000000e+00> : vector<8x128xf32>
    %424 = tpu.matmul %422, %423, %cst_134 {dimension_numbers = #tpu.dot_dimension_numbers<[1], [0], [0], [1], [0, 0, 1, 1], [], []>} : vector<8x32xbf16>, vector<32x128xbf16>, vector<8x128xf32> -> vector<8x128xf32>
    %425 = arith.addf %421, %424 : vector<8x128xf32>
    %426 = arith.negf %425 : vector<8x128xf32>
    %427 = math.exp %426 : vector<8x128xf32>
    %cst_135 = arith.constant 1.000000e+00 : f32
    %428 = vector.broadcast %cst_135 : f32 to vector<8x128xf32>
    %429 = arith.addf %428, %427 : vector<8x128xf32>
    %430 = arith.divf %428, %429 : vector<8x128xf32>
    %431 = arith.mulf %430, %10 : vector<8x128xf32>
    %432 = arith.addf %431, %15 : vector<8x128xf32>
    %433 = vector.extract_strided_slice %432 {offsets = [0, 0], sizes = [8, 32], strides = [1, 1]} : vector<8x128xf32> to vector<8x32xf32>
    %434 = vector.extract_strided_slice %432 {offsets = [0, 32], sizes = [8, 32], strides = [1, 1]} : vector<8x128xf32> to vector<8x32xf32>
    %435 = vector.extract_strided_slice %432 {offsets = [0, 64], sizes = [8, 32], strides = [1, 1]} : vector<8x128xf32> to vector<8x32xf32>
    %436 = vector.extract_strided_slice %432 {offsets = [0, 96], sizes = [8, 32], strides = [1, 1]} : vector<8x128xf32> to vector<8x32xf32>
    %437 = arith.mulf %434, %415 : vector<8x32xf32>
    %438 = arith.mulf %433, %435 : vector<8x32xf32>
    %439 = arith.addf %437, %438 : vector<8x32xf32>
    %440 = math.tanh %439 : vector<8x32xf32>
    %441 = arith.mulf %436, %440 : vector<8x32xf32>
    %c8_i32_136 = arith.constant 8 : i32
    %442 = arith.truncf %441 : vector<8x32xf32> to vector<8x32xbf16>
    %c0_137 = arith.constant 0 : index
    %c0_138 = arith.constant 0 : index
    %443 = vector.load %arg7[%c0_137, %c0_138] : memref<32x16xbf16, #tpu.memory_space<vmem>>, vector<32x16xbf16>
    %cst_139 = arith.constant dense<0.000000e+00> : vector<8x16xf32>
    %444 = tpu.matmul %442, %443, %cst_139 {dimension_numbers = #tpu.dot_dimension_numbers<[1], [0], [0], [1], [0, 0, 1, 1], [], []>} : vector<8x32xbf16>, vector<32x16xbf16>, vector<8x16xf32> -> vector<8x16xf32>
    %c0_140 = arith.constant 0 : index
    %c0_141 = arith.constant 0 : index
    %445 = vector.load %arg8[%c0_140, %c0_141] : memref<1x16xf32, #tpu.memory_space<vmem>>, vector<1x16xf32>
    %446 = vector.broadcast %445 : vector<1x16xf32> to vector<8x16xf32>
    %447 = arith.addf %444, %446 : vector<8x16xf32>
    %cst_142 = arith.constant 0.000000e+00 : f32
    %448 = vector.broadcast %cst_142 : f32 to vector<8x16xf32>
    %449 = arith.cmpf oge, %447, %448 : vector<8x16xf32>
    %cst_143 = arith.constant 0.00999999977 : f32
    %450 = vector.broadcast %cst_143 : f32 to vector<8x16xf32>
    %451 = arith.mulf %450, %447 : vector<8x16xf32>
    %452 = arith.select %449, %447, %451 : vector<8x16xi1>, vector<8x16xf32>
    %c0_144 = arith.constant 0 : index
    %c0_145 = arith.constant 0 : index
    %453 = vector.load %arg9[%c0_144, %c0_145] : memref<1x16xf32, #tpu.memory_space<vmem>>, vector<1x16xf32>
    %454 = vector.broadcast %453 : vector<1x16xf32> to vector<8x16xf32>
    %455 = arith.mulf %452, %454 : vector<8x16xf32>
    %cst_146 = arith.constant dense<0.000000e+00> : vector<8xf32>
    %456 = vector.multi_reduction <add>, %455, %cst_146 [1] : vector<8x16xf32> to vector<8xf32>
    %457 = vector.shape_cast %456 : vector<8xf32> to vector<8x1xf32>
    %c0_147 = arith.constant 0 : index
    %c0_148 = arith.constant 0 : index
    %458 = vector.load %arg10[%c0_147, %c0_148] : memref<1x1xf32, #tpu.memory_space<vmem>>, vector<1x1xf32>
    %459 = vector.broadcast %458 : vector<1x1xf32> to vector<8x1xf32>
    %460 = arith.addf %457, %459 : vector<8x1xf32>
    %c0_149 = arith.constant 0 : index
    %c0_150 = arith.constant 0 : index
    %461 = vector.load %arg11[%c0_149, %c0_150] : memref<8x1xf32, #tpu.memory_space<vmem>>, vector<8x1xf32>
    tpu.vector_store %arg11[%c0_149, %c0_150], %460 {strides = array<i32>} : memref<8x1xf32, #tpu.memory_space<vmem>>, vector<8x1xf32>,
    return
  }
}

</mosaic_0001>

<llo_original>
// kernel: tpu_custom_call.1
$region0: #{tpu_custom_call.1}
  #allocation0 [shape = 'u32[]', space=smem, size = 0x4, offset = 0x4, fixed_abs, tag = 'smem constant byte address 0x4 - core index']
  #allocation1 [shape = 'u32[144,128]{1,0:T(1,128)}', space=vmem, size = 0x12000, scoped, tag = 'internal scratch']
  #allocation2 [shape = 'bf16[64,32]{1,0:T(8,128)(2,1)}', space=vmem, size = 0x4000, scoped, tag = 'scratch operand']
  #allocation3 [shape = 'f32[64,128]{1,0:T(8,128)}', space=vmem, size = 0x8000, scoped, tag = 'scratch operand']
  #allocation4 [shape = 'f32[1,1]{1,0:T(1,128)S(1)}', space=vmem, size = 0x200, scoped, tag = 'scoped memory for tpu_custom_call.1']
  %s0 = inlined_call_operand.vmem [shape: bf16[64,4], index: 0, kind: input, shape index: {}]
  %s1 = inlined_call_operand.vmem [shape: bf16[4,128], index: 1, kind: input, shape index: {}]
  %s2 = inlined_call_operand.vmem [shape: bf16[32,128], index: 2, kind: input, shape index: {}]
  %s3 = inlined_call_operand.vmem [shape: f32[1,128], index: 3, kind: input, shape index: {}]
  %s4 = inlined_call_operand.vmem [shape: bf16[32,128], index: 4, kind: input, shape index: {}]
  %s5 = inlined_call_operand.vmem [shape: bf16[32,128], index: 5, kind: input, shape index: {}]
  %s6 = inlined_call_operand.vmem [shape: f32[1,128], index: 6, kind: input, shape index: {}]
  %s7 = inlined_call_operand.vmem [shape: bf16[32,16], index: 7, kind: input, shape index: {}]
  %s8 = inlined_call_operand.vmem [shape: f32[1,16], index: 8, kind: input, shape index: {}]
  %s9 = inlined_call_operand.vmem [shape: f32[1,16], index: 9, kind: input, shape index: {}]
  %s10 = inlined_call_operand.<no memory space> [shape: f32[1,1], index: 10, kind: input, shape index: {}]
  %s11 = inlined_call_operand.vmem [shape: f32[8,1], index: 11, kind: output, shape index: {}]
  %s12 = sld [smem:[#allocation0]]
  $region54: #{tpu_custom_call.1} parent=0
    _
  %s14 = ssub.s32 1, %s12
  %s15 = scalar_select 0, %s14, %s12
  %v16 = vstv %s10
  %17 = vst [vmem:[#allocation4] sm:$0x1] %v16
  // Predicated region
  $region2: #{tpu_custom_call.1} parent=0 // pred_check
    _
  $region3: #{tpu_custom_call.1} parent=0 // pred_check_branch
    %19 = sbr.rel (0) target = $region5
  $region4: #{tpu_custom_call.1} parent=0 // pred_region
    _
  $region5: #{tpu_custom_call.1} parent=0 // pred_fallthru
    _
  // Predicated region
  $region6: #{tpu_custom_call.1} parent=0 // pred_check
    _
  $region7: #{tpu_custom_call.1} parent=0 // pred_check_branch
    %21 = sbr.rel (0) target = $region9
  $region8: #{tpu_custom_call.1} parent=0 // pred_region
    _
  $region9: #{tpu_custom_call.1} parent=0 // pred_fallthru
    _
  // Predicated region
  $region10: #{tpu_custom_call.1} parent=0 // pred_check
    _
  $region11: #{tpu_custom_call.1} parent=0 // pred_check_branch
    %23 = sbr.rel (0) target = $region13
  $region12: #{tpu_custom_call.1} parent=0 // pred_region
    _
  $region13: #{tpu_custom_call.1} parent=0 // pred_fallthru
    _
  // Predicated region
  $region14: #{tpu_custom_call.1} parent=0 // pred_check
    _
  $region15: #{tpu_custom_call.1} parent=0 // pred_check_branch
    %25 = sbr.rel (0) target = $region17
  $region16: #{tpu_custom_call.1} parent=0 // pred_region
    _
  $region17: #{tpu_custom_call.1} parent=0 // pred_fallthru
    _
  // Predicated region
  $region18: #{tpu_custom_call.1} parent=0 // pred_check
    _
  $region19: #{tpu_custom_call.1} parent=0 // pred_check_branch
    %27 = sbr.rel (0) target = $region21
  $region20: #{tpu_custom_call.1} parent=0 // pred_region
    _
  $region21: #{tpu_custom_call.1} parent=0 // pred_fallthru
    _
  // Predicated region
  $region22: #{tpu_custom_call.1} parent=0 // pred_check
    _
  $region23: #{tpu_custom_call.1} parent=0 // pred_check_branch
    %29 = sbr.rel (0) target = $region25
  $region24: #{tpu_custom_call.1} parent=0 // pred_region
    _
  $region25: #{tpu_custom_call.1} parent=0 // pred_fallthru
    _
  // Predicated region
  $region26: #{tpu_custom_call.1} parent=0 // pred_check
    _
  $region27: #{tpu_custom_call.1} parent=0 // pred_check_branch
    %31 = sbr.rel (0) target = $region29
  $region28: #{tpu_custom_call.1} parent=0 // pred_region
    _
  $region29: #{tpu_custom_call.1} parent=0 // pred_fallthru
    _
  // Predicated region
  $region30: #{tpu_custom_call.1} parent=0 // pred_check
    _
  $region31: #{tpu_custom_call.1} parent=0 // pred_check_branch
    %33 = sbr.rel (0) target = $region33
  $region32: #{tpu_custom_call.1} parent=0 // pred_region
    _
  $region33: #{tpu_custom_call.1} parent=0 // pred_fallthru
    _
  // Predicated region
  $region34: #{tpu_custom_call.1} parent=0 // pred_check
    _
  $region35: #{tpu_custom_call.1} parent=0 // pred_check_branch
    %35 = sbr.rel (0) target = $region37
  $region36: #{tpu_custom_call.1} parent=0 // pred_region
    _
  $region37: #{tpu_custom_call.1} parent=0 // pred_fallthru
    _
  // Predicated region
  $region38: #{tpu_custom_call.1} parent=0 // pred_check
    _
  $region39: #{tpu_custom_call.1} parent=0 // pred_check_branch
    %37 = sbr.rel (0) target = $region41
  $region40: #{tpu_custom_call.1} parent=0 // pred_region
    _
  $region41: #{tpu_custom_call.1} parent=0 // pred_fallthru
    _
  // Predicated region
  $region42: #{tpu_custom_call.1} parent=0 // pred_check
    _
  $region43: #{tpu_custom_call.1} parent=0 // pred_check_branch
    %39 = sbr.rel (0) target = $region45
  $region44: #{tpu_custom_call.1} parent=0 // pred_region
    _
  $region45: #{tpu_custom_call.1} parent=0 // pred_fallthru
    _
  %v41 = vlaneseq
  %v42 = vand.u32 %v41, 127
  %vm43 = vcmp.ge.s32.totalorder %v42, 64
  %vm44 = vcmp.lt.s32.totalorder %v42, 96
  %vm45 = vmand %vm43, %vm44
  %v46 = vsel %vm45, 2.0, 1.0
  %v47 = vsel %vm45, -1.0, 0.0
  %v48 = vld [vmem:[%s0] sm:$0xf]
  %v49 = vld [vmem:[%s0 + $0x4] sm:$0xf]
  %v50 = vld [vmem:[%s0 + $0x8] sm:$0xf]
  %v51 = vld [vmem:[%s0 + $0xc] sm:$0xf]
  %v52 = vld [vmem:[%s0 + $0x10] sm:$0xf]
  %v53 = vld [vmem:[%s0 + $0x14] sm:$0xf]
  %v54 = vld [vmem:[%s0 + $0x18] sm:$0xf]
  %v55 = vld [vmem:[%s0 + $0x1c] sm:$0xf]
  %v56 = vld [vmem:[%s1] sm:$0x3]
  %v57 = vld [vmem:[%s3] sm:$0x1]
  %v59 = vlaneseq
  %v60 = vshrl.u32 %v59, 7
  %v61 = vsub.s32 0, %v60
  %v62 = vrot.slane %v57, %v61
  %v72 = vunpack.c.l.b16 %v48
  %v73 = vunpack.c.l.b16 %v49
  %v74 = vunpack.c.l.b16 %v50
  %v75 = vunpack.c.l.b16 %v51
  %v76 = vunpack.c.l.b16 %v52
  %v77 = vunpack.c.l.b16 %v53
  %v78 = vunpack.c.l.b16 %v54
  %v79 = vunpack.c.l.b16 %v55
  %v80 = vpack.c.b16 %v73, %v72
  %v81 = vpack.c.b16 %v75, %v74
  %v82 = vpack.c.b16 %v77, %v76
  %v83 = vpack.c.b16 %v79, %v78
  %vm84 = vcmask 31744
  %v86 = vsel %vm84, %v80, 0
  %v89 = vsel %vm84, %v81, 0
  %v92 = vsel %vm84, %v82, 0
  %v95 = vsel %vm84, %v83, 0
  %vm97 = vcmask 1041408
  %v99 = vsel %vm97, %v56, 0
  %101 = vmatprep.subr.bf16.mxu0 0
  %102 = vmatpush1.bf16.msra.mxu0 0
  %103 = vmatprep.subr.bf16.mxu0 0
  %104 = vmatpush1.bf16.msra.mxu0 0
  %105 = vmatprep.subr.bf16.mxu0 0
  %106 = vmatpush1.bf16.msra.mxu0 0
  %107 = vmatprep.subr.bf16.mxu0 0
  %108 = vmatpush1.bf16.msra.mxu0 0
  %109 = vmatprep.subr.bf16.mxu0 0
  %110 = vmatpush1.bf16.msra.mxu0 0
  %111 = vmatprep.subr.bf16.mxu0 0
  %112 = vmatpush1.bf16.msra.mxu0 0
  %113 = vmatprep.subr.bf16.mxu0 0
  %114 = vmatpush1.bf16.msra.mxu0 0
  %115 = vmatprep.subr.bf16.mxu0 0
  %116 = vmatpush1.bf16.msra.mxu0 %v99
  %117 = vmatprep.subr.bf16.mxu0 0
  %118 = vmatpush2.bf16.msra.mxu0 0
  %119 = vmatprep.subr.bf16.mxu0 0
  %120 = vmatpush2.bf16.msra.mxu0 0
  %121 = vmatprep.subr.bf16.mxu0 0
  %122 = vmatpush2.bf16.msra.mxu0 0
  %123 = vmatprep.subr.bf16.mxu0 0
  %124 = vmatpush2.bf16.msra.mxu0 0
  %125 = vmatprep.subr.bf16.mxu0 0
  %126 = vmatpush2.bf16.msra.mxu0 0
  %127 = vmatprep.subr.bf16.mxu0 0
  %128 = vmatpush2.bf16.msra.mxu0 0
  %129 = vmatprep.subr.bf16.mxu0 0
  %130 = vmatpush2.bf16.msra.mxu0 0
  %131 = vmatprep.subr.bf16.mxu0 0
  %132 = vmatpush2.bf16.msra.mxu0 0
  %133 = vmatprep.mubr.bf16.mxu0 0
  %134 = vmatmul.mubr.bf16.gmra.mxu0 %v86
  %v135 = vpop.f32.mrf.mxu0
  %v136 = vadd.f32 %v62, %v135
  %v137 = vpop.f32.mrf.mxu0
  %v138 = vpop.f32.mrf.mxu0
  %v139 = vadd.f32 %v62, %v138
  %v140 = vpop.f32.mrf.mxu0
  %141 = vmatprep.mubr.bf16.mxu0 0
  %142 = vmatmul.mubr.bf16.gmra.mxu0 %v89
  %v143 = vpop.f32.mrf.mxu0
  %v144 = vadd.f32 %v62, %v143
  %v145 = vpop.f32.mrf.mxu0
  %v146 = vpop.f32.mrf.mxu0
  %v147 = vadd.f32 %v62, %v146
  %v148 = vpop.f32.mrf.mxu0
  %149 = vmatprep.mubr.bf16.mxu0 0
  %150 = vmatmul.mubr.bf16.gmra.mxu0 %v92
  %v151 = vpop.f32.mrf.mxu0
  %v152 = vadd.f32 %v62, %v151
  %v153 = vpop.f32.mrf.mxu0
  %v154 = vpop.f32.mrf.mxu0
  %v155 = vadd.f32 %v62, %v154
  %v156 = vpop.f32.mrf.mxu0
  %157 = vmatprep.mubr.bf16.mxu0 0
  %158 = vmatmul.mubr.bf16.gmra.mxu0 %v95
  %v159 = vpop.f32.mrf.mxu0
  %v160 = vadd.f32 %v62, %v159
  %v161 = vpop.f32.mrf.mxu0
  %v162 = vpop.f32.mrf.mxu0
  %v163 = vadd.f32 %v62, %v162
  %v164 = vpop.f32.mrf.mxu0
  %165 = vdwg.mxu0
  %166 = vst [vmem:[#allocation3] sm:$0xff] %v136
  %167 = vst [vmem:[#allocation3 + $0x8] sm:$0xff] %v139
  %168 = vst [vmem:[#allocation3 + $0x10] sm:$0xff] %v144
  %169 = vst [vmem:[#allocation3 + $0x18] sm:$0xff] %v147
  %170 = vst [vmem:[#allocation3 + $0x20] sm:$0xff] %v152
  %171 = vst [vmem:[#allocation3 + $0x28] sm:$0xff] %v155
  %172 = vst [vmem:[#allocation3 + $0x30] sm:$0xff] %v160
  %173 = vst [vmem:[#allocation3 + $0x38] sm:$0xff] %v163
  %v174 = vld [vmem:[#allocation3] sm:$0xff]
  %v175 = vld [vmem:[%s2] sm:$0xf]
  %v176 = vld [vmem:[%s2 + $0x4] sm:$0xf]
  %v177 = vld [vmem:[%s2 + $0x8] sm:$0xf]
  %v178 = vld [vmem:[%s2 + $0xc] sm:$0xf]
  %v183 = vunpack.c.l.b16 %v175
  %v184 = vunpack.c.l.b16 %v176
  %v185 = vunpack.c.l.b16 %v177
  %v186 = vunpack.c.l.b16 %v178
  %v187 = vpack.c.b16 %v184, %v183
  %v188 = vpack.c.b16 %v186, %v185
  %vm191 = vcmask 261120
  %v193 = vsel %vm191, 0, 0
  %195 = vmatprep.subr.bf16.mxu0 0
  %196 = vmatpush1.bf16.msra.mxu0 0
  %197 = vmatprep.subr.bf16.mxu0 0
  %198 = vmatpush1.bf16.msra.mxu0 0
  %199 = vmatprep.subr.bf16.mxu0 0
  %200 = vmatpush1.bf16.msra.mxu0 0
  %201 = vmatprep.subr.bf16.mxu0 0
  %202 = vmatpush1.bf16.msra.mxu0 0
  %203 = vmatprep.subr.bf16.mxu0 0
  %204 = vmatpush1.bf16.msra.mxu0 0
  %205 = vmatprep.subr.bf16.mxu0 0
  %206 = vmatpush1.bf16.msra.mxu0 0
  %207 = vmatprep.subr.bf16.mxu0 0
  %208 = vmatpush1.bf16.msra.mxu0 %v188
  %209 = vmatprep.subr.bf16.mxu0 0
  %210 = vmatpush1.bf16.msra.mxu0 %v187
  %211 = vmatprep.subr.bf16.mxu0 0
  %212 = vmatpush2.bf16.msra.mxu0 0
  %213 = vmatprep.subr.bf16.mxu0 0
  %214 = vmatpush2.bf16.msra.mxu0 0
  %215 = vmatprep.subr.bf16.mxu0 0
  %216 = vmatpush2.bf16.msra.mxu0 0
  %217 = vmatprep.subr.bf16.mxu0 0
  %218 = vmatpush2.bf16.msra.mxu0 0
  %219 = vmatprep.subr.bf16.mxu0 0
  %220 = vmatpush2.bf16.msra.mxu0 0
  %221 = vmatprep.subr.bf16.mxu0 0
  %222 = vmatpush2.bf16.msra.mxu0 0
  %223 = vmatprep.subr.bf16.mxu0 0
  %224 = vmatpush2.bf16.msra.mxu0 0
  %225 = vmatprep.subr.bf16.mxu0 0
  %226 = vmatpush2.bf16.msra.mxu0 0
  %227 = vmatprep.mubr.bf16.mxu0 0
  %228 = vmatmul.mubr.bf16.gmra.mxu0 %v193
  %v229 = vpop.f32.mrf.mxu0
  %v230 = vadd.f32 0.0, %v229
  %v231 = vpop.f32.mrf.mxu0
  %v232 = vpop.f32.mrf.mxu0
  %v233 = vpop.f32.mrf.mxu0
  %234 = vdwg.mxu0
  %v235 = vadd.f32 %v174, %v230
  %v236 = vxor.u32 %v235, 2147483648
  %v237 = vmul.f32 %v236, 1.442695
  %v238 = vpow.pop %v237
  %v239 = vadd.f32 %v238, 1.0
  %v240 = vrcp.pop %v239
  %v241 = vmul.f32 1.0, %v240
  %v242 = vmul.f32 %v241, %v46
  %v243 = vadd.f32 %v242, %v47
  %v244 = vmul.f32 %v243, 0.0
  %246 = vrot.lane.b32.xlu0 %v243, 64
  %v247 = vpop.permute.xlu0 %246
  %v249 = vmul.f32 %v243, %v247
  %251 = vrot.lane.b32.xlu0 %v249, 32
  %v252 = vpop.permute.xlu0 %251
  %v254 = vadd.f32 %v244, %v252
  %v255 = vtanh.pop %v254
  %257 = vrot.lane.b32.xlu0 %v255, 64
  %v258 = vpop.permute.xlu0 %257
  %v260 = vmul.f32 %v243, %v258
  %v261 = vpack.c.bf16 %v260, %v260
  %v263 = vunpack.c.l.b16 %v261
  %v264 = vpack.c.b16 %v263, %v263
  %265 = vrot.lane.b32.xlu0 %v264, 32
  %v266 = vpop.permute.xlu0 %265
  %vm268 = vcmask 257024
  %269 = vst.msk [vmem:[#allocation2] sm:$0xf] %vm268, %v266
  %s270 = scalar_lea.vmem [#allocation3], 8
  %v271 = vld [vmem:[%s270] sm:$0xff]
  %v272 = vld [vmem:[%s2] sm:$0xf]
  %v273 = vld [vmem:[%s2 + $0x4] sm:$0xf]
  %v274 = vld [vmem:[%s2 + $0x8] sm:$0xf]
  %v275 = vld [vmem:[%s2 + $0xc] sm:$0xf]
  %276 = vrot.lane.b32.xlu0 %v261, 32
  %v277 = vpop.permute.xlu0 %276
  %v282 = vunpack.c.l.b16 %v272
  %v283 = vunpack.c.l.b16 %v273
  %v284 = vunpack.c.l.b16 %v274
  %v285 = vunpack.c.l.b16 %v275
  %v286 = vpack.c.b16 %v283, %v282
  %v287 = vpack.c.b16 %v285, %v284
  %v291 = vsel %vm191, %v277, 0
  %293 = vmatprep.subr.bf16.mxu0 0
  %294 = vmatpush1.bf16.msra.mxu0 0
  %295 = vmatprep.subr.bf16.mxu0 0
  %296 = vmatpush1.bf16.msra.mxu0 0
  %297 = vmatprep.subr.bf16.mxu0 0
  %298 = vmatpush1.bf16.msra.mxu0 0
  %299 = vmatprep.subr.bf16.mxu0 0
  %300 = vmatpush1.bf16.msra.mxu0 0
  %301 = vmatprep.subr.bf16.mxu0 0
  %302 = vmatpush1.bf16.msra.mxu0 0
  %303 = vmatprep.subr.bf16.mxu0 0
  %304 = vmatpush1.bf16.msra.mxu0 0
  %305 = vmatprep.subr.bf16.mxu0 0
  %306 = vmatpush1.bf16.msra.mxu0 %v287
  %307 = vmatprep.subr.bf16.mxu0 0
  %308 = vmatpush1.bf16.msra.mxu0 %v286
  %309 = vmatprep.subr.bf16.mxu0 0
  %310 = vmatpush2.bf16.msra.mxu0 0
  %311 = vmatprep.subr.bf16.mxu0 0
  %312 = vmatpush2.bf16.msra.mxu0 0
  %313 = vmatprep.subr.bf16.mxu0 0
  %314 = vmatpush2.bf16.msra.mxu0 0
  %315 = vmatprep.subr.bf16.mxu0 0
  %316 = vmatpush2.bf16.msra.mxu0 0
  %317 = vmatprep.subr.bf16.mxu0 0
  %318 = vmatpush2.bf16.msra.mxu0 0
  %319 = vmatprep.subr.bf16.mxu0 0
  %320 = vmatpush2.bf16.msra.mxu0 0
  %321 = vmatprep.subr.bf16.mxu0 0
  %322 = vmatpush2.bf16.msra.mxu0 0
  %323 = vmatprep.subr.bf16.mxu0 0
  %324 = vmatpush2.bf16.msra.mxu0 0
  %325 = vmatprep.mubr.bf16.mxu0 0
  %326 = vmatmul.mubr.bf16.gmra.mxu0 %v291
  %v327 = vpop.f32.mrf.mxu0
  %v328 = vadd.f32 0.0, %v327
  %v329 = vpop.f32.mrf.mxu0
  %v330 = vpop.f32.mrf.mxu0
  %v331 = vpop.f32.mrf.mxu0
  %332 = vdwg.mxu0
  %v333 = vadd.f32 %v271, %v328
  %v334 = vxor.u32 %v333, 2147483648
  %v335 = vmul.f32 %v334, 1.442695
  %v336 = vpow.pop %v335
  %v337 = vadd.f32 %v336, 1.0
  %v338 = vrcp.pop %v337
  %v339 = vmul.f32 1.0, %v338
  %v340 = vmul.f32 %v339, %v46
  %v341 = vadd.f32 %v340, %v47
  %v342 = vmul.f32 %v341, %v254
  %344 = vrot.lane.b32.xlu0 %v341, 64
  %v345 = vpop.permute.xlu0 %344
  %v347 = vmul.f32 %v341, %v345
  %349 = vrot.lane.b32.xlu0 %v347, 32
  %v350 = vpop.permute.xlu0 %349
  %v352 = vadd.f32 %v342, %v350
  %v353 = vtanh.pop %v352
  %355 = vrot.lane.b32.xlu0 %v353, 64
  %v356 = vpop.permute.xlu0 %355
  %v358 = vmul.f32 %v341, %v356
  %v359 = vpack.c.bf16 %v358, %v358
  %v361 = vunpack.c.l.b16 %v359
  %v362 = vpack.c.b16 %v361, %v361
  %363 = vrot.lane.b32.xlu0 %v362, 32
  %v364 = vpop.permute.xlu0 %363
  %s366 = scalar_lea.vmem [#allocation2], 4
  %367 = vst.msk [vmem:[%s366] sm:$0xf] %vm268, %v364
  %s368 = scalar_lea.vmem [#allocation3], 16
  %v369 = vld [vmem:[%s368] sm:$0xff]
  %v370 = vld [vmem:[%s2] sm:$0xf]
  %v371 = vld [vmem:[%s2 + $0x4] sm:$0xf]
  %v372 = vld [vmem:[%s2 + $0x8] sm:$0xf]
  %v373 = vld [vmem:[%s2 + $0xc] sm:$0xf]
  %374 = vrot.lane.b32.xlu0 %v359, 32
  %v375 = vpop.permute.xlu0 %374
  %v380 = vunpack.c.l.b16 %v370
  %v381 = vunpack.c.l.b16 %v371
  %v382 = vunpack.c.l.b16 %v372
  %v383 = vunpack.c.l.b16 %v373
  %v384 = vpack.c.b16 %v381, %v380
  %v385 = vpack.c.b16 %v383, %v382
  %v389 = vsel %vm191, %v375, 0
  %391 = vmatprep.subr.bf16.mxu0 0
  %392 = vmatpush1.bf16.msra.mxu0 0
  %393 = vmatprep.subr.bf16.mxu0 0
  %394 = vmatpush1.bf16.msra.mxu0 0
  %395 = vmatprep.subr.bf16.mxu0 0
  %396 = vmatpush1.bf16.msra.mxu0 0
  %397 = vmatprep.subr.bf16.mxu0 0
  %398 = vmatpush1.bf16.msra.mxu0 0
  %399 = vmatprep.subr.bf16.mxu0 0
  %400 = vmatpush1.bf16.msra.mxu0 0
  %401 = vmatprep.subr.bf16.mxu0 0
  %402 = vmatpush1.bf16.msra.mxu0 0
  %403 = vmatprep.subr.bf16.mxu0 0
  %404 = vmatpush1.bf16.msra.mxu0 %v385
  %405 = vmatprep.subr.bf16.mxu0 0
  %406 = vmatpush1.bf16.msra.mxu0 %v384
  %407 = vmatprep.subr.bf16.mxu0 0
  %408 = vmatpush2.bf16.msra.mxu0 0
  %409 = vmatprep.subr.bf16.mxu0 0
  %410 = vmatpush2.bf16.msra.mxu0 0
  %411 = vmatprep.subr.bf16.mxu0 0
  %412 = vmatpush2.bf16.msra.mxu0 0
  %413 = vmatprep.subr.bf16.mxu0 0
  %414 = vmatpush2.bf16.msra.mxu0 0
  %415 = vmatprep.subr.bf16.mxu0 0
  %416 = vmatpush2.bf16.msra.mxu0 0
  %417 = vmatprep.subr.bf16.mxu0 0
  %418 = vmatpush2.bf16.msra.mxu0 0
  %419 = vmatprep.subr.bf16.mxu0 0
  %420 = vmatpush2.bf16.msra.mxu0 0
  %421 = vmatprep.subr.bf16.mxu0 0
  %422 = vmatpush2.bf16.msra.mxu0 0
  %423 = vmatprep.mubr.bf16.mxu0 0
  %424 = vmatmul.mubr.bf16.gmra.mxu0 %v389
  %v425 = vpop.f32.mrf.mxu0
  %v426 = vadd.f32 0.0, %v425
  %v427 = vpop.f32.mrf.mxu0
  %v428 = vpop.f32.mrf.mxu0
  %v429 = vpop.f32.mrf.mxu0
  %430 = vdwg.mxu0
  %v431 = vadd.f32 %v369, %v426
  %v432 = vxor.u32 %v431, 2147483648
  %v433 = vmul.f32 %v432, 1.442695
  %v434 = vpow.pop %v433
  %v435 = vadd.f32 %v434, 1.0
  %v436 = vrcp.pop %v435
  %v437 = vmul.f32 1.0, %v436
  %v438 = vmul.f32 %v437, %v46
  %v439 = vadd.f32 %v438, %v47
  %v440 = vmul.f32 %v439, %v352
  %442 = vrot.lane.b32.xlu0 %v439, 64
  %v443 = vpop.permute.xlu0 %442
  %v445 = vmul.f32 %v439, %v443
  %447 = vrot.lane.b32.xlu0 %v445, 32
  %v448 = vpop.permute.xlu0 %447
  %v450 = vadd.f32 %v440, %v448
  %v451 = vtanh.pop %v450
  %453 = vrot.lane.b32.xlu0 %v451, 64
  %v454 = vpop.permute.xlu0 %453
  %v456 = vmul.f32 %v439, %v454
  %v457 = vpack.c.bf16 %v456, %v456
  %v459 = vunpack.c.l.b16 %v457
  %v460 = vpack.c.b16 %v459, %v459
  %461 = vrot.lane.b32.xlu0 %v460, 32
  %v462 = vpop.permute.xlu0 %461
  %s464 = scalar_lea.vmem [#allocation2], 8
  %465 = vst.msk [vmem:[%s464] sm:$0xf] %vm268, %v462
  %s466 = scalar_lea.vmem [#allocation3], 24
  %v467 = vld [vmem:[%s466] sm:$0xff]
  %v468 = vld [vmem:[%s2] sm:$0xf]
  %v469 = vld [vmem:[%s2 + $0x4] sm:$0xf]
  %v470 = vld [vmem:[%s2 + $0x8] sm:$0xf]
  %v471 = vld [vmem:[%s2 + $0xc] sm:$0xf]
  %472 = vrot.lane.b32.xlu0 %v457, 32
  %v473 = vpop.permute.xlu0 %472
  %v478 = vunpack.c.l.b16 %v468
  %v479 = vunpack.c.l.b16 %v469
  %v480 = vunpack.c.l.b16 %v470
  %v481 = vunpack.c.l.b16 %v471
  %v482 = vpack.c.b16 %v479, %v478
  %v483 = vpack.c.b16 %v481, %v480
  %v487 = vsel %vm191, %v473, 0
  %489 = vmatprep.subr.bf16.mxu0 0
  %490 = vmatpush1.bf16.msra.mxu0 0
  %491 = vmatprep.subr.bf16.mxu0 0
  %492 = vmatpush1.bf16.msra.mxu0 0
  %493 = vmatprep.subr.bf16.mxu0 0
  %494 = vmatpush1.bf16.msra.mxu0 0
  %495 = vmatprep.subr.bf16.mxu0 0
  %496 = vmatpush1.bf16.msra.mxu0 0
  %497 = vmatprep.subr.bf16.mxu0 0
  %498 = vmatpush1.bf16.msra.mxu0 0
  %499 = vmatprep.subr.bf16.mxu0 0
  %500 = vmatpush1.bf16.msra.mxu0 0
  %501 = vmatprep.subr.bf16.mxu0 0
  %502 = vmatpush1.bf16.msra.mxu0 %v483
  %503 = vmatprep.subr.bf16.mxu0 0
  %504 = vmatpush1.bf16.msra.mxu0 %v482
  %505 = vmatprep.subr.bf16.mxu0 0
  %506 = vmatpush2.bf16.msra.mxu0 0
  %507 = vmatprep.subr.bf16.mxu0 0
  %508 = vmatpush2.bf16.msra.mxu0 0
  %509 = vmatprep.subr.bf16.mxu0 0
  %510 = vmatpush2.bf16.msra.mxu0 0
  %511 = vmatprep.subr.bf16.mxu0 0
  %512 = vmatpush2.bf16.msra.mxu0 0
  %513 = vmatprep.subr.bf16.mxu0 0
  %514 = vmatpush2.bf16.msra.mxu0 0
  %515 = vmatprep.subr.bf16.mxu0 0
  %516 = vmatpush2.bf16.msra.mxu0 0
  %517 = vmatprep.subr.bf16.mxu0 0
  %518 = vmatpush2.bf16.msra.mxu0 0
  %519 = vmatprep.subr.bf16.mxu0 0
  %520 = vmatpush2.bf16.msra.mxu0 0
  %521 = vmatprep.mubr.bf16.mxu0 0
  %522 = vmatmul.mubr.bf16.gmra.mxu0 %v487
  %v523 = vpop.f32.mrf.mxu0
  %v524 = vadd.f32 0.0, %v523
  %v525 = vpop.f32.mrf.mxu0
  %v526 = vpop.f32.mrf.mxu0
  %v527 = vpop.f32.mrf.mxu0
  %528 = vdwg.mxu0
  %v529 = vadd.f32 %v467, %v524
  %v530 = vxor.u32 %v529, 2147483648
  %v531 = vmul.f32 %v530, 1.442695
  %v532 = vpow.pop %v531
  %v533 = vadd.f32 %v532, 1.0
  %v534 = vrcp.pop %v533
  %v535 = vmul.f32 1.0, %v534
  %v536 = vmul.f32 %v535, %v46
  %v537 = vadd.f32 %v536, %v47
  %v538 = vmul.f32 %v537, %v450
  %540 = vrot.lane.b32.xlu0 %v537, 64
  %v541 = vpop.permute.xlu0 %540
  %v543 = vmul.f32 %v537, %v541
  %545 = vrot.lane.b32.xlu0 %v543, 32
  %v546 = vpop.permute.xlu0 %545
  %v548 = vadd.f32 %v538, %v546
  %v549 = vtanh.pop %v548
  %551 = vrot.lane.b32.xlu0 %v549, 64
  %v552 = vpop.permute.xlu0 %551
  %v554 = vmul.f32 %v537, %v552
  %v555 = vpack.c.bf16 %v554, %v554
  %v557 = vunpack.c.l.b16 %v555
  %v558 = vpack.c.b16 %v557, %v557
  %559 = vrot.lane.b32.xlu0 %v558, 32
  %v560 = vpop.permute.xlu0 %559
  %s562 = scalar_lea.vmem [#allocation2], 12
  %563 = vst.msk [vmem:[%s562] sm:$0xf] %vm268, %v560
  %s564 = scalar_lea.vmem [#allocation3], 32
  %v565 = vld [vmem:[%s564] sm:$0xff]
  %v566 = vld [vmem:[%s2] sm:$0xf]
  %v567 = vld [vmem:[%s2 + $0x4] sm:$0xf]
  %v568 = vld [vmem:[%s2 + $0x8] sm:$0xf]
  %v569 = vld [vmem:[%s2 + $0xc] sm:$0xf]
  %570 = vrot.lane.b32.xlu0 %v555, 32
  %v571 = vpop.permute.xlu0 %570
  %v576 = vunpack.c.l.b16 %v566
  %v577 = vunpack.c.l.b16 %v567
  %v578 = vunpack.c.l.b16 %v568
  %v579 = vunpack.c.l.b16 %v569
  %v580 = vpack.c.b16 %v577, %v576
  %v581 = vpack.c.b16 %v579, %v578
  %v585 = vsel %vm191, %v571, 0
  %587 = vmatprep.subr.bf16.mxu0 0
  %588 = vmatpush1.bf16.msra.mxu0 0
  %589 = vmatprep.subr.bf16.mxu0 0
  %590 = vmatpush1.bf16.msra.mxu0 0
  %591 = vmatprep.subr.bf16.mxu0 0
  %592 = vmatpush1.bf16.msra.mxu0 0
  %593 = vmatprep.subr.bf16.mxu0 0
  %594 = vmatpush1.bf16.msra.mxu0 0
  %595 = vmatprep.subr.bf16.mxu0 0
  %596 = vmatpush1.bf16.msra.mxu0 0
  %597 = vmatprep.subr.bf16.mxu0 0
  %598 = vmatpush1.bf16.msra.mxu0 0
  %599 = vmatprep.subr.bf16.mxu0 0
  %600 = vmatpush1.bf16.msra.mxu0 %v581
  %601 = vmatprep.subr.bf16.mxu0 0
  %602 = vmatpush1.bf16.msra.mxu0 %v580
  %603 = vmatprep.subr.bf16.mxu0 0
  %604 = vmatpush2.bf16.msra.mxu0 0
  %605 = vmatprep.subr.bf16.mxu0 0
  %606 = vmatpush2.bf16.msra.mxu0 0
  %607 = vmatprep.subr.bf16.mxu0 0
  %608 = vmatpush2.bf16.msra.mxu0 0
  %609 = vmatprep.subr.bf16.mxu0 0
  %610 = vmatpush2.bf16.msra.mxu0 0
  %611 = vmatprep.subr.bf16.mxu0 0
  %612 = vmatpush2.bf16.msra.mxu0 0
  %613 = vmatprep.subr.bf16.mxu0 0
  %614 = vmatpush2.bf16.msra.mxu0 0
  %615 = vmatprep.subr.bf16.mxu0 0
  %616 = vmatpush2.bf16.msra.mxu0 0
  %617 = vmatprep.subr.bf16.mxu0 0
  %618 = vmatpush2.bf16.msra.mxu0 0
  %619 = vmatprep.mubr.bf16.mxu0 0
  %620 = vmatmul.mubr.bf16.gmra.mxu0 %v585
  %v621 = vpop.f32.mrf.mxu0
  %v622 = vadd.f32 0.0, %v621
  %v623 = vpop.f32.mrf.mxu0
  %v624 = vpop.f32.mrf.mxu0
  %v625 = vpop.f32.mrf.mxu0
  %626 = vdwg.mxu0
  %v627 = vadd.f32 %v565, %v622
  %v628 = vxor.u32 %v627, 2147483648
  %v629 = vmul.f32 %v628, 1.442695
  %v630 = vpow.pop %v629
  %v631 = vadd.f32 %v630, 1.0
  %v632 = vrcp.pop %v631
  %v633 = vmul.f32 1.0, %v632
  %v634 = vmul.f32 %v633, %v46
  %v635 = vadd.f32 %v634, %v47
  %v636 = vmul.f32 %v635, %v548
  %638 = vrot.lane.b32.xlu0 %v635, 64
  %v639 = vpop.permute.xlu0 %638
  %v641 = vmul.f32 %v635, %v639
  %643 = vrot.lane.b32.xlu0 %v641, 32
  %v644 = vpop.permute.xlu0 %643
  %v646 = vadd.f32 %v636, %v644
  %v647 = vtanh.pop %v646
  %649 = vrot.lane.b32.xlu0 %v647, 64
  %v650 = vpop.permute.xlu0 %649
  %v652 = vmul.f32 %v635, %v650
  %v653 = vpack.c.bf16 %v652, %v652
  %v655 = vunpack.c.l.b16 %v653
  %v656 = vpack.c.b16 %v655, %v655
  %657 = vrot.lane.b32.xlu0 %v656, 32
  %v658 = vpop.permute.xlu0 %657
  %s660 = scalar_lea.vmem [#allocation2], 16
  %661 = vst.msk [vmem:[%s660] sm:$0xf] %vm268, %v658
  %s662 = scalar_lea.vmem [#allocation3], 40
  %v663 = vld [vmem:[%s662] sm:$0xff]
  %v664 = vld [vmem:[%s2] sm:$0xf]
  %v665 = vld [vmem:[%s2 + $0x4] sm:$0xf]
  %v666 = vld [vmem:[%s2 + $0x8] sm:$0xf]
  %v667 = vld [vmem:[%s2 + $0xc] sm:$0xf]
  %668 = vrot.lane.b32.xlu0 %v653, 32
  %v669 = vpop.permute.xlu0 %668
  %v674 = vunpack.c.l.b16 %v664
  %v675 = vunpack.c.l.b16 %v665
  %v676 = vunpack.c.l.b16 %v666
  %v677 = vunpack.c.l.b16 %v667
  %v678 = vpack.c.b16 %v675, %v674
  %v679 = vpack.c.b16 %v677, %v676
  %v683 = vsel %vm191, %v669, 0
  %685 = vmatprep.subr.bf16.mxu0 0
  %686 = vmatpush1.bf16.msra.mxu0 0
  %687 = vmatprep.subr.bf16.mxu0 0
  %688 = vmatpush1.bf16.msra.mxu0 0
  %689 = vmatprep.subr.bf16.mxu0 0
  %690 = vmatpush1.bf16.msra.mxu0 0
  %691 = vmatprep.subr.bf16.mxu0 0
  %692 = vmatpush1.bf16.msra.mxu0 0
  %693 = vmatprep.subr.bf16.mxu0 0
  %694 = vmatpush1.bf16.msra.mxu0 0
  %695 = vmatprep.subr.bf16.mxu0 0
  %696 = vmatpush1.bf16.msra.mxu0 0
  %697 = vmatprep.subr.bf16.mxu0 0
  %698 = vmatpush1.bf16.msra.mxu0 %v679
  %699 = vmatprep.subr.bf16.mxu0 0
  %700 = vmatpush1.bf16.msra.mxu0 %v678
  %701 = vmatprep.subr.bf16.mxu0 0
  %702 = vmatpush2.bf16.msra.mxu0 0
  %703 = vmatprep.subr.bf16.mxu0 0
  %704 = vmatpush2.bf16.msra.mxu0 0
  %705 = vmatprep.subr.bf16.mxu0 0
  %706 = vmatpush2.bf16.msra.mxu0 0
  %707 = vmatprep.subr.bf16.mxu0 0
  %708 = vmatpush2.bf16.msra.mxu0 0
  %709 = vmatprep.subr.bf16.mxu0 0
  %710 = vmatpush2.bf16.msra.mxu0 0
  %711 = vmatprep.subr.bf16.mxu0 0
  %712 = vmatpush2.bf16.msra.mxu0 0
  %713 = vmatprep.subr.bf16.mxu0 0
  %714 = vmatpush2.bf16.msra.mxu0 0
  %715 = vmatprep.subr.bf16.mxu0 0
  %716 = vmatpush2.bf16.msra.mxu0 0
  %717 = vmatprep.mubr.bf16.mxu0 0
  %718 = vmatmul.mubr.bf16.gmra.mxu0 %v683
  %v719 = vpop.f32.mrf.mxu0
  %v720 = vadd.f32 0.0, %v719
  %v721 = vpop.f32.mrf.mxu0
  %v722 = vpop.f32.mrf.mxu0
  %v723 = vpop.f32.mrf.mxu0
  %724 = vdwg.mxu0
  %v725 = vadd.f32 %v663, %v720
  %v726 = vxor.u32 %v725, 2147483648
  %v727 = vmul.f32 %v726, 1.442695
  %v728 = vpow.pop %v727
  %v729 = vadd.f32 %v728, 1.0
  %v730 = vrcp.pop %v729
  %v731 = vmul.f32 1.0, %v730
  %v732 = vmul.f32 %v731, %v46
  %v733 = vadd.f32 %v732, %v47
  %v734 = vmul.f32 %v733, %v646
  %736 = vrot.lane.b32.xlu0 %v733, 64
  %v737 = vpop.permute.xlu0 %736
  %v739 = vmul.f32 %v733, %v737
  %741 = vrot.lane.b32.xlu0 %v739, 32
  %v742 = vpop.permute.xlu0 %741
  %v744 = vadd.f32 %v734, %v742
  %v745 = vtanh.pop %v744
  %747 = vrot.lane.b32.xlu0 %v745, 64
  %v748 = vpop.permute.xlu0 %747
  %v750 = vmul.f32 %v733, %v748
  %v751 = vpack.c.bf16 %v750, %v750
  %v753 = vunpack.c.l.b16 %v751
  %v754 = vpack.c.b16 %v753, %v753
  %755 = vrot.lane.b32.xlu0 %v754, 32
  %v756 = vpop.permute.xlu0 %755
  %s758 = scalar_lea.vmem [#allocation2], 20
  %759 = vst.msk [vmem:[%s758] sm:$0xf] %vm268, %v756
  %s760 = scalar_lea.vmem [#allocation3], 48
  %v761 = vld [vmem:[%s760] sm:$0xff]
  %v762 = vld [vmem:[%s2] sm:$0xf]
  %v763 = vld [vmem:[%s2 + $0x4] sm:$0xf]
  %v764 = vld [vmem:[%s2 + $0x8] sm:$0xf]
  %v765 = vld [vmem:[%s2 + $0xc] sm:$0xf]
  %766 = vrot.lane.b32.xlu0 %v751, 32
  %v767 = vpop.permute.xlu0 %766
  %v772 = vunpack.c.l.b16 %v762
  %v773 = vunpack.c.l.b16 %v763
  %v774 = vunpack.c.l.b16 %v764
  %v775 = vunpack.c.l.b16 %v765
  %v776 = vpack.c.b16 %v773, %v772
  %v777 = vpack.c.b16 %v775, %v774
  %v781 = vsel %vm191, %v767, 0
  %783 = vmatprep.subr.bf16.mxu0 0
  %784 = vmatpush1.bf16.msra.mxu0 0
  %785 = vmatprep.subr.bf16.mxu0 0
  %786 = vmatpush1.bf16.msra.mxu0 0
  %787 = vmatprep.subr.bf16.mxu0 0
  %788 = vmatpush1.bf16.msra.mxu0 0
  %789 = vmatprep.subr.bf16.mxu0 0
  %790 = vmatpush1.bf16.msra.mxu0 0
  %791 = vmatprep.subr.bf16.mxu0 0
  %792 = vmatpush1.bf16.msra.mxu0 0
  %793 = vmatprep.subr.bf16.mxu0 0
  %794 = vmatpush1.bf16.msra.mxu0 0
  %795 = vmatprep.subr.bf16.mxu0 0
  %796 = vmatpush1.bf16.msra.mxu0 %v777
  %797 = vmatprep.subr.bf16.mxu0 0
  %798 = vmatpush1.bf16.msra.mxu0 %v776
  %799 = vmatprep.subr.bf16.mxu0 0
  %800 = vmatpush2.bf16.msra.mxu0 0
  %801 = vmatprep.subr.bf16.mxu0 0
  %802 = vmatpush2.bf16.msra.mxu0 0
  %803 = vmatprep.subr.bf16.mxu0 0
  %804 = vmatpush2.bf16.msra.mxu0 0
  %805 = vmatprep.subr.bf16.mxu0 0
  %806 = vmatpush2.bf16.msra.mxu0 0
  %807 = vmatprep.subr.bf16.mxu0 0
  %808 = vmatpush2.bf16.msra.mxu0 0
  %809 = vmatprep.subr.bf16.mxu0 0
  %810 = vmatpush2.bf16.msra.mxu0 0
  %811 = vmatprep.subr.bf16.mxu0 0
  %812 = vmatpush2.bf16.msra.mxu0 0
  %813 = vmatprep.subr.bf16.mxu0 0
  %814 = vmatpush2.bf16.msra.mxu0 0
  %815 = vmatprep.mubr.bf16.mxu0 0
  %816 = vmatmul.mubr.bf16.gmra.mxu0 %v781
  %v817 = vpop.f32.mrf.mxu0
  %v818 = vadd.f32 0.0, %v817
  %v819 = vpop.f32.mrf.mxu0
  %v820 = vpop.f32.mrf.mxu0
  %v821 = vpop.f32.mrf.mxu0
  %822 = vdwg.mxu0
  %v823 = vadd.f32 %v761, %v818
  %v824 = vxor.u32 %v823, 2147483648
  %v825 = vmul.f32 %v824, 1.442695
  %v826 = vpow.pop %v825
  %v827 = vadd.f32 %v826, 1.0
  %v828 = vrcp.pop %v827
  %v829 = vmul.f32 1.0, %v828
  %v830 = vmul.f32 %v829, %v46
  %v831 = vadd.f32 %v830, %v47
  %v832 = vmul.f32 %v831, %v744
  %834 = vrot.lane.b32.xlu0 %v831, 64
  %v835 = vpop.permute.xlu0 %834
  %v837 = vmul.f32 %v831, %v835
  %839 = vrot.lane.b32.xlu0 %v837, 32
  %v840 = vpop.permute.xlu0 %839
  %v842 = vadd.f32 %v832, %v840
  %v843 = vtanh.pop %v842
  %845 = vrot.lane.b32.xlu0 %v843, 64
  %v846 = vpop.permute.xlu0 %845
  %v848 = vmul.f32 %v831, %v846
  %v849 = vpack.c.bf16 %v848, %v848
  %v851 = vunpack.c.l.b16 %v849
  %v852 = vpack.c.b16 %v851, %v851
  %853 = vrot.lane.b32.xlu0 %v852, 32
  %v854 = vpop.permute.xlu0 %853
  %s856 = scalar_lea.vmem [#allocation2], 24
  %857 = vst.msk [vmem:[%s856] sm:$0xf] %vm268, %v854
  %s858 = scalar_lea.vmem [#allocation3], 56
  %v859 = vld [vmem:[%s858] sm:$0xff]
  %v860 = vld [vmem:[%s2] sm:$0xf]
  %v861 = vld [vmem:[%s2 + $0x4] sm:$0xf]
  %v862 = vld [vmem:[%s2 + $0x8] sm:$0xf]
  %v863 = vld [vmem:[%s2 + $0xc] sm:$0xf]
  %864 = vrot.lane.b32.xlu0 %v849, 32
  %v865 = vpop.permute.xlu0 %864
  %v870 = vunpack.c.l.b16 %v860
  %v871 = vunpack.c.l.b16 %v861
  %v872 = vunpack.c.l.b16 %v862
  %v873 = vunpack.c.l.b16 %v863
  %v874 = vpack.c.b16 %v871, %v870
  %v875 = vpack.c.b16 %v873, %v872
  %v879 = vsel %vm191, %v865, 0
  %881 = vmatprep.subr.bf16.mxu0 0
  %882 = vmatpush1.bf16.msra.mxu0 0
  %883 = vmatprep.subr.bf16.mxu0 0
  %884 = vmatpush1.bf16.msra.mxu0 0
  %885 = vmatprep.subr.bf16.mxu0 0
  %886 = vmatpush1.bf16.msra.mxu0 0
  %887 = vmatprep.subr.bf16.mxu0 0
  %888 = vmatpush1.bf16.msra.mxu0 0
  %889 = vmatprep.subr.bf16.mxu0 0
  %890 = vmatpush1.bf16.msra.mxu0 0
  %891 = vmatprep.subr.bf16.mxu0 0
  %892 = vmatpush1.bf16.msra.mxu0 0
  %893 = vmatprep.subr.bf16.mxu0 0
  %894 = vmatpush1.bf16.msra.mxu0 %v875
  %895 = vmatprep.subr.bf16.mxu0 0
  %896 = vmatpush1.bf16.msra.mxu0 %v874
  %897 = vmatprep.subr.bf16.mxu0 0
  %898 = vmatpush2.bf16.msra.mxu0 0
  %899 = vmatprep.subr.bf16.mxu0 0
  %900 = vmatpush2.bf16.msra.mxu0 0
  %901 = vmatprep.subr.bf16.mxu0 0
  %902 = vmatpush2.bf16.msra.mxu0 0
  %903 = vmatprep.subr.bf16.mxu0 0
  %904 = vmatpush2.bf16.msra.mxu0 0
  %905 = vmatprep.subr.bf16.mxu0 0
  %906 = vmatpush2.bf16.msra.mxu0 0
  %907 = vmatprep.subr.bf16.mxu0 0
  %908 = vmatpush2.bf16.msra.mxu0 0
  %909 = vmatprep.subr.bf16.mxu0 0
  %910 = vmatpush2.bf16.msra.mxu0 0
  %911 = vmatprep.subr.bf16.mxu0 0
  %912 = vmatpush2.bf16.msra.mxu0 0
  %913 = vmatprep.mubr.bf16.mxu0 0
  %914 = vmatmul.mubr.bf16.gmra.mxu0 %v879
  %v915 = vpop.f32.mrf.mxu0
  %v916 = vadd.f32 0.0, %v915
  %v917 = vpop.f32.mrf.mxu0
  %v918 = vpop.f32.mrf.mxu0
  %v919 = vpop.f32.mrf.mxu0
  %920 = vdwg.mxu0
  %v921 = vadd.f32 %v859, %v916
  %v922 = vxor.u32 %v921, 2147483648
  %v923 = vmul.f32 %v922, 1.442695
  %v924 = vpow.pop %v923
  %v925 = vadd.f32 %v924, 1.0
  %v926 = vrcp.pop %v925
  %v927 = vmul.f32 1.0, %v926
  %v928 = vmul.f32 %v927, %v46
  %v929 = vadd.f32 %v928, %v47
  %v930 = vmul.f32 %v929, %v842
  %932 = vrot.lane.b32.xlu0 %v929, 64
  %v933 = vpop.permute.xlu0 %932
  %v935 = vmul.f32 %v929, %v933
  %937 = vrot.lane.b32.xlu0 %v935, 32
  %v938 = vpop.permute.xlu0 %937
  %v940 = vadd.f32 %v930, %v938
  %v941 = vtanh.pop %v940
  %943 = vrot.lane.b32.xlu0 %v941, 64
  %v944 = vpop.permute.xlu0 %943
  %v946 = vmul.f32 %v929, %v944
  %v947 = vpack.c.bf16 %v946, %v946
  %v949 = vunpack.c.l.b16 %v947
  %v950 = vpack.c.b16 %v949, %v949
  %951 = vrot.lane.b32.xlu0 %v950, 32
  %v952 = vpop.permute.xlu0 %951
  %s954 = scalar_lea.vmem [#allocation2], 28
  %955 = vst.msk [vmem:[%s954] sm:$0xf] %vm268, %v952
  %v956 = vld [vmem:[#allocation2] sm:$0xf]
  %v957 = vld [vmem:[#allocation2 + $0x4] sm:$0xf]
  %v958 = vld [vmem:[#allocation2 + $0x8] sm:$0xf]
  %v959 = vld [vmem:[#allocation2 + $0xc] sm:$0xf]
  %v960 = vld [vmem:[#allocation2 + $0x10] sm:$0xf]
  %v961 = vld [vmem:[#allocation2 + $0x14] sm:$0xf]
  %v962 = vld [vmem:[#allocation2 + $0x18] sm:$0xf]
  %v963 = vld [vmem:[#allocation2 + $0x1c] sm:$0xf]
  %v964 = vld [vmem:[%s4] sm:$0xf]
  %v965 = vld [vmem:[%s4 + $0x4] sm:$0xf]
  %v966 = vld [vmem:[%s4 + $0x8] sm:$0xf]
  %v967 = vld [vmem:[%s4 + $0xc] sm:$0xf]
  %v968 = vld [vmem:[%s6] sm:$0x1]
  %v970 = vlaneseq
  %v971 = vshrl.u32 %v970, 7
  %v972 = vsub.s32 0, %v971
  %v973 = vrot.slane %v968, %v972
  %v983 = vunpack.c.l.b16 %v956
  %v984 = vunpack.c.l.b16 %v957
  %v985 = vunpack.c.l.b16 %v958
  %v986 = vunpack.c.l.b16 %v959
  %v987 = vunpack.c.l.b16 %v960
  %v988 = vunpack.c.l.b16 %v961
  %v989 = vunpack.c.l.b16 %v962
  %v990 = vunpack.c.l.b16 %v963
  %v991 = vpack.c.b16 %v984, %v983
  %v992 = vpack.c.b16 %v986, %v985
  %v993 = vpack.c.b16 %v988, %v987
  %v994 = vpack.c.b16 %v990, %v989
  %v999 = vunpack.c.l.b16 %v964
  %v1000 = vunpack.c.l.b16 %v965
  %v1001 = vunpack.c.l.b16 %v966
  %v1002 = vunpack.c.l.b16 %v967
  %v1003 = vpack.c.b16 %v1000, %v999
  %v1004 = vpack.c.b16 %v1002, %v1001
  %v1008 = vsel %vm191, %v991, 0
  %v1011 = vsel %vm191, %v992, 0
  %v1014 = vsel %vm191, %v993, 0
  %v1017 = vsel %vm191, %v994, 0
  %1019 = vmatprep.subr.bf16.mxu0 0
  %1020 = vmatpush1.bf16.msra.mxu0 0
  %1021 = vmatprep.subr.bf16.mxu0 0
  %1022 = vmatpush1.bf16.msra.mxu0 0
  %1023 = vmatprep.subr.bf16.mxu0 0
  %1024 = vmatpush1.bf16.msra.mxu0 0
  %1025 = vmatprep.subr.bf16.mxu0 0
  %1026 = vmatpush1.bf16.msra.mxu0 0
  %1027 = vmatprep.subr.bf16.mxu0 0
  %1028 = vmatpush1.bf16.msra.mxu0 0
  %1029 = vmatprep.subr.bf16.mxu0 0
  %1030 = vmatpush1.bf16.msra.mxu0 0
  %1031 = vmatprep.subr.bf16.mxu0 0
  %1032 = vmatpush1.bf16.msra.mxu0 %v1004
  %1033 = vmatprep.subr.bf16.mxu0 0
  %1034 = vmatpush1.bf16.msra.mxu0 %v1003
  %1035 = vmatprep.subr.bf16.mxu0 0
  %1036 = vmatpush2.bf16.msra.mxu0 0
  %1037 = vmatprep.subr.bf16.mxu0 0
  %1038 = vmatpush2.bf16.msra.mxu0 0
  %1039 = vmatprep.subr.bf16.mxu0 0
  %1040 = vmatpush2.bf16.msra.mxu0 0
  %1041 = vmatprep.subr.bf16.mxu0 0
  %1042 = vmatpush2.bf16.msra.mxu0 0
  %1043 = vmatprep.subr.bf16.mxu0 0
  %1044 = vmatpush2.bf16.msra.mxu0 0
  %1045 = vmatprep.subr.bf16.mxu0 0
  %1046 = vmatpush2.bf16.msra.mxu0 0
  %1047 = vmatprep.subr.bf16.mxu0 0
  %1048 = vmatpush2.bf16.msra.mxu0 0
  %1049 = vmatprep.subr.bf16.mxu0 0
  %1050 = vmatpush2.bf16.msra.mxu0 0
  %1051 = vmatprep.mubr.bf16.mxu0 0
  %1052 = vmatmul.mubr.bf16.gmra.mxu0 %v1008
  %v1053 = vpop.f32.mrf.mxu0
  %v1054 = vadd.f32 %v973, %v1053
  %v1055 = vpop.f32.mrf.mxu0
  %v1056 = vpop.f32.mrf.mxu0
  %v1057 = vadd.f32 %v973, %v1056
  %v1058 = vpop.f32.mrf.mxu0
  %1059 = vmatprep.mubr.bf16.mxu0 0
  %1060 = vmatmul.mubr.bf16.gmra.mxu0 %v1011
  %v1061 = vpop.f32.mrf.mxu0
  %v1062 = vadd.f32 %v973, %v1061
  %v1063 = vpop.f32.mrf.mxu0
  %v1064 = vpop.f32.mrf.mxu0
  %v1065 = vadd.f32 %v973, %v1064
  %v1066 = vpop.f32.mrf.mxu0
  %1067 = vmatprep.mubr.bf16.mxu0 0
  %1068 = vmatmul.mubr.bf16.gmra.mxu0 %v1014
  %v1069 = vpop.f32.mrf.mxu0
  %v1070 = vadd.f32 %v973, %v1069
  %v1071 = vpop.f32.mrf.mxu0
  %v1072 = vpop.f32.mrf.mxu0
  %v1073 = vadd.f32 %v973, %v1072
  %v1074 = vpop.f32.mrf.mxu0
  %1075 = vmatprep.mubr.bf16.mxu0 0
  %1076 = vmatmul.mubr.bf16.gmra.mxu0 %v1017
  %v1077 = vpop.f32.mrf.mxu0
  %v1078 = vadd.f32 %v973, %v1077
  %v1079 = vpop.f32.mrf.mxu0
  %v1080 = vpop.f32.mrf.mxu0
  %v1081 = vadd.f32 %v973, %v1080
  %v1082 = vpop.f32.mrf.mxu0
  %1083 = vdwg.mxu0
  %1084 = vst [vmem:[#allocation3] sm:$0xff] %v1054
  %1085 = vst [vmem:[#allocation3 + $0x8] sm:$0xff] %v1057
  %1086 = vst [vmem:[#allocation3 + $0x10] sm:$0xff] %v1062
  %1087 = vst [vmem:[#allocation3 + $0x18] sm:$0xff] %v1065
  %1088 = vst [vmem:[#allocation3 + $0x20] sm:$0xff] %v1070
  %1089 = vst [vmem:[#allocation3 + $0x28] sm:$0xff] %v1073
  %1090 = vst [vmem:[#allocation3 + $0x30] sm:$0xff] %v1078
  %1091 = vst [vmem:[#allocation3 + $0x38] sm:$0xff] %v1081
  %v1092 = vld [vmem:[#allocation3] sm:$0xff]
  %v1093 = vld [vmem:[%s5] sm:$0xf]
  %v1094 = vld [vmem:[%s5 + $0x4] sm:$0xf]
  %v1095 = vld [vmem:[%s5 + $0x8] sm:$0xf]
  %v1096 = vld [vmem:[%s5 + $0xc] sm:$0xf]
  %v1101 = vunpack.c.l.b16 %v1093
  %v1102 = vunpack.c.l.b16 %v1094
  %v1103 = vunpack.c.l.b16 %v1095
  %v1104 = vunpack.c.l.b16 %v1096
  %v1105 = vpack.c.b16 %v1102, %v1101
  %v1106 = vpack.c.b16 %v1104, %v1103
  %1109 = vmatprep.subr.bf16.mxu0 0
  %1110 = vmatpush1.bf16.msra.mxu0 0
  %1111 = vmatprep.subr.bf16.mxu0 0
  %1112 = vmatpush1.bf16.msra.mxu0 0
  %1113 = vmatprep.subr.bf16.mxu0 0
  %1114 = vmatpush1.bf16.msra.mxu0 0
  %1115 = vmatprep.subr.bf16.mxu0 0
  %1116 = vmatpush1.bf16.msra.mxu0 0
  %1117 = vmatprep.subr.bf16.mxu0 0
  %1118 = vmatpush1.bf16.msra.mxu0 0
  %1119 = vmatprep.subr.bf16.mxu0 0
  %1120 = vmatpush1.bf16.msra.mxu0 0
  %1121 = vmatprep.subr.bf16.mxu0 0
  %1122 = vmatpush1.bf16.msra.mxu0 %v1106
  %1123 = vmatprep.subr.bf16.mxu0 0
  %1124 = vmatpush1.bf16.msra.mxu0 %v1105
  %1125 = vmatprep.subr.bf16.mxu0 0
  %1126 = vmatpush2.bf16.msra.mxu0 0
  %1127 = vmatprep.subr.bf16.mxu0 0
  %1128 = vmatpush2.bf16.msra.mxu0 0
  %1129 = vmatprep.subr.bf16.mxu0 0
  %1130 = vmatpush2.bf16.msra.mxu0 0
  %1131 = vmatprep.subr.bf16.mxu0 0
  %1132 = vmatpush2.bf16.msra.mxu0 0
  %1133 = vmatprep.subr.bf16.mxu0 0
  %1134 = vmatpush2.bf16.msra.mxu0 0
  %1135 = vmatprep.subr.bf16.mxu0 0
  %1136 = vmatpush2.bf16.msra.mxu0 0
  %1137 = vmatprep.subr.bf16.mxu0 0
  %1138 = vmatpush2.bf16.msra.mxu0 0
  %1139 = vmatprep.subr.bf16.mxu0 0
  %1140 = vmatpush2.bf16.msra.mxu0 0
  %1141 = vmatprep.mubr.bf16.mxu0 0
  %1142 = vmatmul.mubr.bf16.gmra.mxu0 %v193
  %v1143 = vpop.f32.mrf.mxu0
  %v1144 = vadd.f32 0.0, %v1143
  %v1145 = vpop.f32.mrf.mxu0
  %v1146 = vpop.f32.mrf.mxu0
  %v1147 = vpop.f32.mrf.mxu0
  %1148 = vdwg.mxu0
  %v1149 = vadd.f32 %v1092, %v1144
  %v1150 = vxor.u32 %v1149, 2147483648
  %v1151 = vmul.f32 %v1150, 1.442695
  %v1152 = vpow.pop %v1151
  %v1153 = vadd.f32 %v1152, 1.0
  %v1154 = vrcp.pop %v1153
  %v1155 = vmul.f32 1.0, %v1154
  %v1156 = vmul.f32 %v1155, %v46
  %v1157 = vadd.f32 %v1156, %v47
  %v1158 = vmul.f32 %v1157, 0.0
  %1160 = vrot.lane.b32.xlu0 %v1157, 64
  %v1161 = vpop.permute.xlu0 %1160
  %v1163 = vmul.f32 %v1157, %v1161
  %1165 = vrot.lane.b32.xlu0 %v1163, 32
  %v1166 = vpop.permute.xlu0 %1165
  %v1168 = vadd.f32 %v1158, %v1166
  %v1169 = vtanh.pop %v1168
  %1171 = vrot.lane.b32.xlu0 %v1169, 64
  %v1172 = vpop.permute.xlu0 %1171
  %v1174 = vmul.f32 %v1157, %v1172
  %v1175 = vld [vmem:[%s270] sm:$0xff]
  %v1176 = vpack.c.bf16 %v1174, %v1174
  %1178 = vrot.lane.b32.xlu0 %v1176, 32
  %v1179 = vpop.permute.xlu0 %1178
  %v1181 = vsel %vm191, %v1179, 0
  %1183 = vmatprep.subr.bf16.mxu0 0
  %1184 = vmatpush1.bf16.msra.mxu0 0
  %1185 = vmatprep.subr.bf16.mxu0 0
  %1186 = vmatpush1.bf16.msra.mxu0 0
  %1187 = vmatprep.subr.bf16.mxu0 0
  %1188 = vmatpush1.bf16.msra.mxu0 0
  %1189 = vmatprep.subr.bf16.mxu0 0
  %1190 = vmatpush1.bf16.msra.mxu0 0
  %1191 = vmatprep.subr.bf16.mxu0 0
  %1192 = vmatpush1.bf16.msra.mxu0 0
  %1193 = vmatprep.subr.bf16.mxu0 0
  %1194 = vmatpush1.bf16.msra.mxu0 0
  %1195 = vmatprep.subr.bf16.mxu0 0
  %1196 = vmatpush1.bf16.msra.mxu0 %v1106
  %1197 = vmatprep.subr.bf16.mxu0 0
  %1198 = vmatpush1.bf16.msra.mxu0 %v1105
  %1199 = vmatprep.subr.bf16.mxu0 0
  %1200 = vmatpush2.bf16.msra.mxu0 0
  %1201 = vmatprep.subr.bf16.mxu0 0
  %1202 = vmatpush2.bf16.msra.mxu0 0
  %1203 = vmatprep.subr.bf16.mxu0 0
  %1204 = vmatpush2.bf16.msra.mxu0 0
  %1205 = vmatprep.subr.bf16.mxu0 0
  %1206 = vmatpush2.bf16.msra.mxu0 0
  %1207 = vmatprep.subr.bf16.mxu0 0
  %1208 = vmatpush2.bf16.msra.mxu0 0
  %1209 = vmatprep.subr.bf16.mxu0 0
  %1210 = vmatpush2.bf16.msra.mxu0 0
  %1211 = vmatprep.subr.bf16.mxu0 0
  %1212 = vmatpush2.bf16.msra.mxu0 0
  %1213 = vmatprep.subr.bf16.mxu0 0
  %1214 = vmatpush2.bf16.msra.mxu0 0
  %1215 = vmatprep.mubr.bf16.mxu0 0
  %1216 = vmatmul.mubr.bf16.gmra.mxu0 %v1181
  %v1217 = vpop.f32.mrf.mxu0
  %v1218 = vadd.f32 0.0, %v1217
  %v1219 = vpop.f32.mrf.mxu0
  %v1220 = vpop.f32.mrf.mxu0
  %v1221 = vpop.f32.mrf.mxu0
  %1222 = vdwg.mxu0
  %v1223 = vadd.f32 %v1175, %v1218
  %v1224 = vxor.u32 %v1223, 2147483648
  %v1225 = vmul.f32 %v1224, 1.442695
  %v1226 = vpow.pop %v1225
  %v1227 = vadd.f32 %v1226, 1.0
  %v1228 = vrcp.pop %v1227
  %v1229 = vmul.f32 1.0, %v1228
  %v1230 = vmul.f32 %v1229, %v46
  %v1231 = vadd.f32 %v1230, %v47
  %v1232 = vmul.f32 %v1231, %v1168
  %1234 = vrot.lane.b32.xlu0 %v1231, 64
  %v1235 = vpop.permute.xlu0 %1234
  %v1237 = vmul.f32 %v1231, %v1235
  %1239 = vrot.lane.b32.xlu0 %v1237, 32
  %v1240 = vpop.permute.xlu0 %1239
  %v1242 = vadd.f32 %v1232, %v1240
  %v1243 = vtanh.pop %v1242
  %1245 = vrot.lane.b32.xlu0 %v1243, 64
  %v1246 = vpop.permute.xlu0 %1245
  %v1248 = vmul.f32 %v1231, %v1246
  %v1249 = vld [vmem:[%s368] sm:$0xff]
  %v1250 = vpack.c.bf16 %v1248, %v1248
  %1252 = vrot.lane.b32.xlu0 %v1250, 32
  %v1253 = vpop.permute.xlu0 %1252
  %v1255 = vsel %vm191, %v1253, 0
  %1257 = vmatprep.subr.bf16.mxu0 0
  %1258 = vmatpush1.bf16.msra.mxu0 0
  %1259 = vmatprep.subr.bf16.mxu0 0
  %1260 = vmatpush1.bf16.msra.mxu0 0
  %1261 = vmatprep.subr.bf16.mxu0 0
  %1262 = vmatpush1.bf16.msra.mxu0 0
  %1263 = vmatprep.subr.bf16.mxu0 0
  %1264 = vmatpush1.bf16.msra.mxu0 0
  %1265 = vmatprep.subr.bf16.mxu0 0
  %1266 = vmatpush1.bf16.msra.mxu0 0
  %1267 = vmatprep.subr.bf16.mxu0 0
  %1268 = vmatpush1.bf16.msra.mxu0 0
  %1269 = vmatprep.subr.bf16.mxu0 0
  %1270 = vmatpush1.bf16.msra.mxu0 %v1106
  %1271 = vmatprep.subr.bf16.mxu0 0
  %1272 = vmatpush1.bf16.msra.mxu0 %v1105
  %1273 = vmatprep.subr.bf16.mxu0 0
  %1274 = vmatpush2.bf16.msra.mxu0 0
  %1275 = vmatprep.subr.bf16.mxu0 0
  %1276 = vmatpush2.bf16.msra.mxu0 0
  %1277 = vmatprep.subr.bf16.mxu0 0
  %1278 = vmatpush2.bf16.msra.mxu0 0
  %1279 = vmatprep.subr.bf16.mxu0 0
  %1280 = vmatpush2.bf16.msra.mxu0 0
  %1281 = vmatprep.subr.bf16.mxu0 0
  %1282 = vmatpush2.bf16.msra.mxu0 0
  %1283 = vmatprep.subr.bf16.mxu0 0
  %1284 = vmatpush2.bf16.msra.mxu0 0
  %1285 = vmatprep.subr.bf16.mxu0 0
  %1286 = vmatpush2.bf16.msra.mxu0 0
  %1287 = vmatprep.subr.bf16.mxu0 0
  %1288 = vmatpush2.bf16.msra.mxu0 0
  %1289 = vmatprep.mubr.bf16.mxu0 0
  %1290 = vmatmul.mubr.bf16.gmra.mxu0 %v1255
  %v1291 = vpop.f32.mrf.mxu0
  %v1292 = vadd.f32 0.0, %v1291
  %v1293 = vpop.f32.mrf.mxu0
  %v1294 = vpop.f32.mrf.mxu0
  %v1295 = vpop.f32.mrf.mxu0
  %1296 = vdwg.mxu0
  %v1297 = vadd.f32 %v1249, %v1292
  %v1298 = vxor.u32 %v1297, 2147483648
  %v1299 = vmul.f32 %v1298, 1.442695
  %v1300 = vpow.pop %v1299
  %v1301 = vadd.f32 %v1300, 1.0
  %v1302 = vrcp.pop %v1301
  %v1303 = vmul.f32 1.0, %v1302
  %v1304 = vmul.f32 %v1303, %v46
  %v1305 = vadd.f32 %v1304, %v47
  %v1306 = vmul.f32 %v1305, %v1242
  %1308 = vrot.lane.b32.xlu0 %v1305, 64
  %v1309 = vpop.permute.xlu0 %1308
  %v1311 = vmul.f32 %v1305, %v1309
  %1313 = vrot.lane.b32.xlu0 %v1311, 32
  %v1314 = vpop.permute.xlu0 %1313
  %v1316 = vadd.f32 %v1306, %v1314
  %v1317 = vtanh.pop %v1316
  %1319 = vrot.lane.b32.xlu0 %v1317, 64
  %v1320 = vpop.permute.xlu0 %1319
  %v1322 = vmul.f32 %v1305, %v1320
  %v1323 = vld [vmem:[%s466] sm:$0xff]
  %v1324 = vpack.c.bf16 %v1322, %v1322
  %1326 = vrot.lane.b32.xlu0 %v1324, 32
  %v1327 = vpop.permute.xlu0 %1326
  %v1329 = vsel %vm191, %v1327, 0
  %1331 = vmatprep.subr.bf16.mxu0 0
  %1332 = vmatpush1.bf16.msra.mxu0 0
  %1333 = vmatprep.subr.bf16.mxu0 0
  %1334 = vmatpush1.bf16.msra.mxu0 0
  %1335 = vmatprep.subr.bf16.mxu0 0
  %1336 = vmatpush1.bf16.msra.mxu0 0
  %1337 = vmatprep.subr.bf16.mxu0 0
  %1338 = vmatpush1.bf16.msra.mxu0 0
  %1339 = vmatprep.subr.bf16.mxu0 0
  %1340 = vmatpush1.bf16.msra.mxu0 0
  %1341 = vmatprep.subr.bf16.mxu0 0
  %1342 = vmatpush1.bf16.msra.mxu0 0
  %1343 = vmatprep.subr.bf16.mxu0 0
  %1344 = vmatpush1.bf16.msra.mxu0 %v1106
  %1345 = vmatprep.subr.bf16.mxu0 0
  %1346 = vmatpush1.bf16.msra.mxu0 %v1105
  %1347 = vmatprep.subr.bf16.mxu0 0
  %1348 = vmatpush2.bf16.msra.mxu0 0
  %1349 = vmatprep.subr.bf16.mxu0 0
  %1350 = vmatpush2.bf16.msra.mxu0 0
  %1351 = vmatprep.subr.bf16.mxu0 0
  %1352 = vmatpush2.bf16.msra.mxu0 0
  %1353 = vmatprep.subr.bf16.mxu0 0
  %1354 = vmatpush2.bf16.msra.mxu0 0
  %1355 = vmatprep.subr.bf16.mxu0 0
  %1356 = vmatpush2.bf16.msra.mxu0 0
  %1357 = vmatprep.subr.bf16.mxu0 0
  %1358 = vmatpush2.bf16.msra.mxu0 0
  %1359 = vmatprep.subr.bf16.mxu0 0
  %1360 = vmatpush2.bf16.msra.mxu0 0
  %1361 = vmatprep.subr.bf16.mxu0 0
  %1362 = vmatpush2.bf16.msra.mxu0 0
  %1363 = vmatprep.mubr.bf16.mxu0 0
  %1364 = vmatmul.mubr.bf16.gmra.mxu0 %v1329
  %v1365 = vpop.f32.mrf.mxu0
  %v1366 = vadd.f32 0.0, %v1365
  %v1367 = vpop.f32.mrf.mxu0
  %v1368 = vpop.f32.mrf.mxu0
  %v1369 = vpop.f32.mrf.mxu0
  %1370 = vdwg.mxu0
  %v1371 = vadd.f32 %v1323, %v1366
  %v1372 = vxor.u32 %v1371, 2147483648
  %v1373 = vmul.f32 %v1372, 1.442695
  %v1374 = vpow.pop %v1373
  %v1375 = vadd.f32 %v1374, 1.0
  %v1376 = vrcp.pop %v1375
  %v1377 = vmul.f32 1.0, %v1376
  %v1378 = vmul.f32 %v1377, %v46
  %v1379 = vadd.f32 %v1378, %v47
  %v1380 = vmul.f32 %v1379, %v1316
  %1382 = vrot.lane.b32.xlu0 %v1379, 64
  %v1383 = vpop.permute.xlu0 %1382
  %v1385 = vmul.f32 %v1379, %v1383
  %1387 = vrot.lane.b32.xlu0 %v1385, 32
  %v1388 = vpop.permute.xlu0 %1387
  %v1390 = vadd.f32 %v1380, %v1388
  %v1391 = vtanh.pop %v1390
  %1393 = vrot.lane.b32.xlu0 %v1391, 64
  %v1394 = vpop.permute.xlu0 %1393
  %v1396 = vmul.f32 %v1379, %v1394
  %v1397 = vld [vmem:[%s564] sm:$0xff]
  %v1398 = vpack.c.bf16 %v1396, %v1396
  %1400 = vrot.lane.b32.xlu0 %v1398, 32
  %v1401 = vpop.permute.xlu0 %1400
  %v1403 = vsel %vm191, %v1401, 0
  %1405 = vmatprep.subr.bf16.mxu0 0
  %1406 = vmatpush1.bf16.msra.mxu0 0
  %1407 = vmatprep.subr.bf16.mxu0 0
  %1408 = vmatpush1.bf16.msra.mxu0 0
  %1409 = vmatprep.subr.bf16.mxu0 0
  %1410 = vmatpush1.bf16.msra.mxu0 0
  %1411 = vmatprep.subr.bf16.mxu0 0
  %1412 = vmatpush1.bf16.msra.mxu0 0
  %1413 = vmatprep.subr.bf16.mxu0 0
  %1414 = vmatpush1.bf16.msra.mxu0 0
  %1415 = vmatprep.subr.bf16.mxu0 0
  %1416 = vmatpush1.bf16.msra.mxu0 0
  %1417 = vmatprep.subr.bf16.mxu0 0
  %1418 = vmatpush1.bf16.msra.mxu0 %v1106
  %1419 = vmatprep.subr.bf16.mxu0 0
  %1420 = vmatpush1.bf16.msra.mxu0 %v1105
  %1421 = vmatprep.subr.bf16.mxu0 0
  %1422 = vmatpush2.bf16.msra.mxu0 0
  %1423 = vmatprep.subr.bf16.mxu0 0
  %1424 = vmatpush2.bf16.msra.mxu0 0
  %1425 = vmatprep.subr.bf16.mxu0 0
  %1426 = vmatpush2.bf16.msra.mxu0 0
  %1427 = vmatprep.subr.bf16.mxu0 0
  %1428 = vmatpush2.bf16.msra.mxu0 0
  %1429 = vmatprep.subr.bf16.mxu0 0
  %1430 = vmatpush2.bf16.msra.mxu0 0
  %1431 = vmatprep.subr.bf16.mxu0 0
  %1432 = vmatpush2.bf16.msra.mxu0 0
  %1433 = vmatprep.subr.bf16.mxu0 0
  %1434 = vmatpush2.bf16.msra.mxu0 0
  %1435 = vmatprep.subr.bf16.mxu0 0
  %1436 = vmatpush2.bf16.msra.mxu0 0
  %1437 = vmatprep.mubr.bf16.mxu0 0
  %1438 = vmatmul.mubr.bf16.gmra.mxu0 %v1403
  %v1439 = vpop.f32.mrf.mxu0
  %v1440 = vadd.f32 0.0, %v1439
  %v1441 = vpop.f32.mrf.mxu0
  %v1442 = vpop.f32.mrf.mxu0
  %v1443 = vpop.f32.mrf.mxu0
  %1444 = vdwg.mxu0
  %v1445 = vadd.f32 %v1397, %v1440
  %v1446 = vxor.u32 %v1445, 2147483648
  %v1447 = vmul.f32 %v1446, 1.442695
  %v1448 = vpow.pop %v1447
  %v1449 = vadd.f32 %v1448, 1.0
  %v1450 = vrcp.pop %v1449
  %v1451 = vmul.f32 1.0, %v1450
  %v1452 = vmul.f32 %v1451, %v46
  %v1453 = vadd.f32 %v1452, %v47
  %v1454 = vmul.f32 %v1453, %v1390
  %1456 = vrot.lane.b32.xlu0 %v1453, 64
  %v1457 = vpop.permute.xlu0 %1456
  %v1459 = vmul.f32 %v1453, %v1457
  %1461 = vrot.lane.b32.xlu0 %v1459, 32
  %v1462 = vpop.permute.xlu0 %1461
  %v1464 = vadd.f32 %v1454, %v1462
  %v1465 = vtanh.pop %v1464
  %1467 = vrot.lane.b32.xlu0 %v1465, 64
  %v1468 = vpop.permute.xlu0 %1467
  %v1470 = vmul.f32 %v1453, %v1468
  %v1471 = vld [vmem:[%s662] sm:$0xff]
  %v1472 = vpack.c.bf16 %v1470, %v1470
  %1474 = vrot.lane.b32.xlu0 %v1472, 32
  %v1475 = vpop.permute.xlu0 %1474
  %v1477 = vsel %vm191, %v1475, 0
  %1479 = vmatprep.subr.bf16.mxu0 0
  %1480 = vmatpush1.bf16.msra.mxu0 0
  %1481 = vmatprep.subr.bf16.mxu0 0
  %1482 = vmatpush1.bf16.msra.mxu0 0
  %1483 = vmatprep.subr.bf16.mxu0 0
  %1484 = vmatpush1.bf16.msra.mxu0 0
  %1485 = vmatprep.subr.bf16.mxu0 0
  %1486 = vmatpush1.bf16.msra.mxu0 0
  %1487 = vmatprep.subr.bf16.mxu0 0
  %1488 = vmatpush1.bf16.msra.mxu0 0
  %1489 = vmatprep.subr.bf16.mxu0 0
  %1490 = vmatpush1.bf16.msra.mxu0 0
  %1491 = vmatprep.subr.bf16.mxu0 0
  %1492 = vmatpush1.bf16.msra.mxu0 %v1106
  %1493 = vmatprep.subr.bf16.mxu0 0
  %1494 = vmatpush1.bf16.msra.mxu0 %v1105
  %1495 = vmatprep.subr.bf16.mxu0 0
  %1496 = vmatpush2.bf16.msra.mxu0 0
  %1497 = vmatprep.subr.bf16.mxu0 0
  %1498 = vmatpush2.bf16.msra.mxu0 0
  %1499 = vmatprep.subr.bf16.mxu0 0
  %1500 = vmatpush2.bf16.msra.mxu0 0
  %1501 = vmatprep.subr.bf16.mxu0 0
  %1502 = vmatpush2.bf16.msra.mxu0 0
  %1503 = vmatprep.subr.bf16.mxu0 0
  %1504 = vmatpush2.bf16.msra.mxu0 0
  %1505 = vmatprep.subr.bf16.mxu0 0
  %1506 = vmatpush2.bf16.msra.mxu0 0
  %1507 = vmatprep.subr.bf16.mxu0 0
  %1508 = vmatpush2.bf16.msra.mxu0 0
  %1509 = vmatprep.subr.bf16.mxu0 0
  %1510 = vmatpush2.bf16.msra.mxu0 0
  %1511 = vmatprep.mubr.bf16.mxu0 0
  %1512 = vmatmul.mubr.bf16.gmra.mxu0 %v1477
  %v1513 = vpop.f32.mrf.mxu0
  %v1514 = vadd.f32 0.0, %v1513
  %v1515 = vpop.f32.mrf.mxu0
  %v1516 = vpop.f32.mrf.mxu0
  %v1517 = vpop.f32.mrf.mxu0
  %1518 = vdwg.mxu0
  %v1519 = vadd.f32 %v1471, %v1514
  %v1520 = vxor.u32 %v1519, 2147483648
  %v1521 = vmul.f32 %v1520, 1.442695
  %v1522 = vpow.pop %v1521
  %v1523 = vadd.f32 %v1522, 1.0
  %v1524 = vrcp.pop %v1523
  %v1525 = vmul.f32 1.0, %v1524
  %v1526 = vmul.f32 %v1525, %v46
  %v1527 = vadd.f32 %v1526, %v47
  %v1528 = vmul.f32 %v1527, %v1464
  %1530 = vrot.lane.b32.xlu0 %v1527, 64
  %v1531 = vpop.permute.xlu0 %1530
  %v1533 = vmul.f32 %v1527, %v1531
  %1535 = vrot.lane.b32.xlu0 %v1533, 32
  %v1536 = vpop.permute.xlu0 %1535
  %v1538 = vadd.f32 %v1528, %v1536
  %v1539 = vtanh.pop %v1538
  %1541 = vrot.lane.b32.xlu0 %v1539, 64
  %v1542 = vpop.permute.xlu0 %1541
  %v1544 = vmul.f32 %v1527, %v1542
  %v1545 = vld [vmem:[%s760] sm:$0xff]
  %v1546 = vpack.c.bf16 %v1544, %v1544
  %1548 = vrot.lane.b32.xlu0 %v1546, 32
  %v1549 = vpop.permute.xlu0 %1548
  %v1551 = vsel %vm191, %v1549, 0
  %1553 = vmatprep.subr.bf16.mxu0 0
  %1554 = vmatpush1.bf16.msra.mxu0 0
  %1555 = vmatprep.subr.bf16.mxu0 0
  %1556 = vmatpush1.bf16.msra.mxu0 0
  %1557 = vmatprep.subr.bf16.mxu0 0
  %1558 = vmatpush1.bf16.msra.mxu0 0
  %1559 = vmatprep.subr.bf16.mxu0 0
  %1560 = vmatpush1.bf16.msra.mxu0 0
  %1561 = vmatprep.subr.bf16.mxu0 0
  %1562 = vmatpush1.bf16.msra.mxu0 0
  %1563 = vmatprep.subr.bf16.mxu0 0
  %1564 = vmatpush1.bf16.msra.mxu0 0
  %1565 = vmatprep.subr.bf16.mxu0 0
  %1566 = vmatpush1.bf16.msra.mxu0 %v1106
  %1567 = vmatprep.subr.bf16.mxu0 0
  %1568 = vmatpush1.bf16.msra.mxu0 %v1105
  %1569 = vmatprep.subr.bf16.mxu0 0
  %1570 = vmatpush2.bf16.msra.mxu0 0
  %1571 = vmatprep.subr.bf16.mxu0 0
  %1572 = vmatpush2.bf16.msra.mxu0 0
  %1573 = vmatprep.subr.bf16.mxu0 0
  %1574 = vmatpush2.bf16.msra.mxu0 0
  %1575 = vmatprep.subr.bf16.mxu0 0
  %1576 = vmatpush2.bf16.msra.mxu0 0
  %1577 = vmatprep.subr.bf16.mxu0 0
  %1578 = vmatpush2.bf16.msra.mxu0 0
  %1579 = vmatprep.subr.bf16.mxu0 0
  %1580 = vmatpush2.bf16.msra.mxu0 0
  %1581 = vmatprep.subr.bf16.mxu0 0
  %1582 = vmatpush2.bf16.msra.mxu0 0
  %1583 = vmatprep.subr.bf16.mxu0 0
  %1584 = vmatpush2.bf16.msra.mxu0 0
  %1585 = vmatprep.mubr.bf16.mxu0 0
  %1586 = vmatmul.mubr.bf16.gmra.mxu0 %v1551
  %v1587 = vpop.f32.mrf.mxu0
  %v1588 = vadd.f32 0.0, %v1587
  %v1589 = vpop.f32.mrf.mxu0
  %v1590 = vpop.f32.mrf.mxu0
  %v1591 = vpop.f32.mrf.mxu0
  %1592 = vdwg.mxu0
  %v1593 = vadd.f32 %v1545, %v1588
  %v1594 = vxor.u32 %v1593, 2147483648
  %v1595 = vmul.f32 %v1594, 1.442695
  %v1596 = vpow.pop %v1595
  %v1597 = vadd.f32 %v1596, 1.0
  %v1598 = vrcp.pop %v1597
  %v1599 = vmul.f32 1.0, %v1598
  %v1600 = vmul.f32 %v1599, %v46
  %v1601 = vadd.f32 %v1600, %v47
  %v1602 = vmul.f32 %v1601, %v1538
  %1604 = vrot.lane.b32.xlu0 %v1601, 64
  %v1605 = vpop.permute.xlu0 %1604
  %v1607 = vmul.f32 %v1601, %v1605
  %1609 = vrot.lane.b32.xlu0 %v1607, 32
  %v1610 = vpop.permute.xlu0 %1609
  %v1612 = vadd.f32 %v1602, %v1610
  %v1613 = vtanh.pop %v1612
  %1615 = vrot.lane.b32.xlu0 %v1613, 64
  %v1616 = vpop.permute.xlu0 %1615
  %v1618 = vmul.f32 %v1601, %v1616
  %v1619 = vld [vmem:[%s858] sm:$0xff]
  %v1620 = vpack.c.bf16 %v1618, %v1618
  %1622 = vrot.lane.b32.xlu0 %v1620, 32
  %v1623 = vpop.permute.xlu0 %1622
  %v1625 = vsel %vm191, %v1623, 0
  %1627 = vmatprep.subr.bf16.mxu0 0
  %1628 = vmatpush1.bf16.msra.mxu0 0
  %1629 = vmatprep.subr.bf16.mxu0 0
  %1630 = vmatpush1.bf16.msra.mxu0 0
  %1631 = vmatprep.subr.bf16.mxu0 0
  %1632 = vmatpush1.bf16.msra.mxu0 0
  %1633 = vmatprep.subr.bf16.mxu0 0
  %1634 = vmatpush1.bf16.msra.mxu0 0
  %1635 = vmatprep.subr.bf16.mxu0 0
  %1636 = vmatpush1.bf16.msra.mxu0 0
  %1637 = vmatprep.subr.bf16.mxu0 0
  %1638 = vmatpush1.bf16.msra.mxu0 0
  %1639 = vmatprep.subr.bf16.mxu0 0
  %1640 = vmatpush1.bf16.msra.mxu0 %v1106
  %1641 = vmatprep.subr.bf16.mxu0 0
  %1642 = vmatpush1.bf16.msra.mxu0 %v1105
  %1643 = vmatprep.subr.bf16.mxu0 0
  %1644 = vmatpush2.bf16.msra.mxu0 0
  %1645 = vmatprep.subr.bf16.mxu0 0
  %1646 = vmatpush2.bf16.msra.mxu0 0
  %1647 = vmatprep.subr.bf16.mxu0 0
  %1648 = vmatpush2.bf16.msra.mxu0 0
  %1649 = vmatprep.subr.bf16.mxu0 0
  %1650 = vmatpush2.bf16.msra.mxu0 0
  %1651 = vmatprep.subr.bf16.mxu0 0
  %1652 = vmatpush2.bf16.msra.mxu0 0
  %1653 = vmatprep.subr.bf16.mxu0 0
  %1654 = vmatpush2.bf16.msra.mxu0 0
  %1655 = vmatprep.subr.bf16.mxu0 0
  %1656 = vmatpush2.bf16.msra.mxu0 0
  %1657 = vmatprep.subr.bf16.mxu0 0
  %1658 = vmatpush2.bf16.msra.mxu0 0
  %1659 = vmatprep.mubr.bf16.mxu0 0
  %1660 = vmatmul.mubr.bf16.gmra.mxu0 %v1625
  %v1661 = vpop.f32.mrf.mxu0
  %v1662 = vadd.f32 0.0, %v1661
  %v1663 = vpop.f32.mrf.mxu0
  %v1664 = vpop.f32.mrf.mxu0
  %v1665 = vpop.f32.mrf.mxu0
  %1666 = vdwg.mxu0
  %v1667 = vadd.f32 %v1619, %v1662
  %v1668 = vxor.u32 %v1667, 2147483648
  %v1669 = vmul.f32 %v1668, 1.442695
  %v1670 = vpow.pop %v1669
  %v1671 = vadd.f32 %v1670, 1.0
  %v1672 = vrcp.pop %v1671
  %v1673 = vmul.f32 1.0, %v1672
  %v1674 = vmul.f32 %v1673, %v46
  %v1675 = vadd.f32 %v1674, %v47
  %v1676 = vmul.f32 %v1675, %v1612
  %1678 = vrot.lane.b32.xlu0 %v1675, 64
  %v1679 = vpop.permute.xlu0 %1678
  %v1681 = vmul.f32 %v1675, %v1679
  %1683 = vrot.lane.b32.xlu0 %v1681, 32
  %v1684 = vpop.permute.xlu0 %1683
  %v1686 = vadd.f32 %v1676, %v1684
  %v1687 = vtanh.pop %v1686
  %1689 = vrot.lane.b32.xlu0 %v1687, 64
  %v1690 = vpop.permute.xlu0 %1689
  %v1692 = vmul.f32 %v1675, %v1690
  %v1693 = vpack.c.bf16 %v1692, %v1692
  %v1694 = vld [vmem:[%s7] sm:$0xf]
  %v1695 = vld [vmem:[%s7 + $0x4] sm:$0xf]
  %v1696 = vld [vmem:[%s7 + $0x8] sm:$0xf]
  %v1697 = vld [vmem:[%s7 + $0xc] sm:$0xf]
  %v1698 = vld [vmem:[%s8] sm:$0x1]
  %v1700 = vlaneseq
  %v1701 = vshrl.u32 %v1700, 7
  %v1702 = vsub.s32 0, %v1701
  %v1703 = vrot.slane %v1698, %v1702
  %1706 = vrot.lane.b32.xlu0 %v1693, 32
  %v1707 = vpop.permute.xlu0 %1706
  %v1712 = vunpack.c.l.b16 %v1694
  %v1713 = vunpack.c.l.b16 %v1695
  %v1714 = vunpack.c.l.b16 %v1696
  %v1715 = vunpack.c.l.b16 %v1697
  %v1716 = vpack.c.b16 %v1713, %v1712
  %v1717 = vpack.c.b16 %v1715, %v1714
  %v1721 = vsel %vm191, %v1707, 0
  %1723 = vmatprep.subr.bf16.mxu0 0
  %1724 = vmatpush1.bf16.msra.mxu0 0
  %1725 = vmatprep.subr.bf16.mxu0 0
  %1726 = vmatpush1.bf16.msra.mxu0 0
  %1727 = vmatprep.subr.bf16.mxu0 0
  %1728 = vmatpush1.bf16.msra.mxu0 0
  %1729 = vmatprep.subr.bf16.mxu0 0
  %1730 = vmatpush1.bf16.msra.mxu0 0
  %1731 = vmatprep.subr.bf16.mxu0 0
  %1732 = vmatpush1.bf16.msra.mxu0 0
  %1733 = vmatprep.subr.bf16.mxu0 0
  %1734 = vmatpush1.bf16.msra.mxu0 0
  %1735 = vmatprep.subr.bf16.mxu0 0
  %1736 = vmatpush1.bf16.msra.mxu0 %v1717
  %1737 = vmatprep.subr.bf16.mxu0 0
  %1738 = vmatpush1.bf16.msra.mxu0 %v1716
  %1739 = vmatprep.subr.bf16.mxu0 0
  %1740 = vmatpush2.bf16.msra.mxu0 0
  %1741 = vmatprep.subr.bf16.mxu0 0
  %1742 = vmatpush2.bf16.msra.mxu0 0
  %1743 = vmatprep.subr.bf16.mxu0 0
  %1744 = vmatpush2.bf16.msra.mxu0 0
  %1745 = vmatprep.subr.bf16.mxu0 0
  %1746 = vmatpush2.bf16.msra.mxu0 0
  %1747 = vmatprep.subr.bf16.mxu0 0
  %1748 = vmatpush2.bf16.msra.mxu0 0
  %1749 = vmatprep.subr.bf16.mxu0 0
  %1750 = vmatpush2.bf16.msra.mxu0 0
  %1751 = vmatprep.subr.bf16.mxu0 0
  %1752 = vmatpush2.bf16.msra.mxu0 0
  %1753 = vmatprep.subr.bf16.mxu0 0
  %1754 = vmatpush2.bf16.msra.mxu0 0
  %1755 = vmatprep.mubr.bf16.mxu0 0
  %1756 = vmatmul.mubr.bf16.gmra.mxu0 %v1721
  %v1757 = vpop.f32.mrf.mxu0
  %v1758 = vadd.f32 %v1703, %v1757
  %v1759 = vpop.f32.mrf.mxu0
  %v1760 = vpop.f32.mrf.mxu0
  %v1761 = vpop.f32.mrf.mxu0
  %1762 = vdwg.mxu0
  %vm1763 = vcmp.ge.f32.partialorder %v1758, 0.0
  %v1764 = vmul.f32 %v1758, 0.01
  %v1765 = vsel %vm1763, %v1758, %v1764
  %v1766 = vld [vmem:[%s9] sm:$0x1]
  %v1768 = vlaneseq
  %v1769 = vshrl.u32 %v1768, 7
  %v1770 = vsub.s32 0, %v1769
  %v1771 = vrot.slane %v1766, %v1770
  %v1773 = vmul.f32 %v1765, %v1771
  %vm1774 = vcmask 130048
  %v1775 = vsel %vm1774, %v1773, 0.0
  %1776 = vadd.xlane.f32.xlu0 %v1775
  %v1777 = vpop.xlane.xlu0 %1776
  %v1778 = vld [vmem:[#allocation4] sm:$0x1]
  %v1780 = vlaneseq
  %v1781 = vshrl.u32 %v1780, 7
  %v1782 = vsub.s32 0, %v1781
  %v1783 = vrot.slane %v1778, %v1782
  %v1785 = vadd.f32 %v1777, %v1783
  %vm1786 = vcmask 7168
  %1787 = vst.msk [vmem:[%s11] sm:$0xff] %vm1786, %v1785
  // Predicated region
  $region46: #{tpu_custom_call.1} parent=0 // pred_check
    _
  $region47: #{tpu_custom_call.1} parent=0 // pred_check_branch
    %1789 = sbr.rel (0) target = $region49
  $region48: #{tpu_custom_call.1} parent=0 // pred_region
    _
  $region49: #{tpu_custom_call.1} parent=0 // pred_fallthru
    _
  // Predicated region
  $region50: #{tpu_custom_call.1} parent=0 // pred_check
    _
  $region51: #{tpu_custom_call.1} parent=0 // pred_check_branch
    %1791 = sbr.rel (0) target = $region53
  $region52: #{tpu_custom_call.1} parent=0 // pred_region
    _
  $region53: #{tpu_custom_call.1} parent=0 // pred_fallthru
    _

</llo_original>
